<compile_context>
chip_gen: v5e
topology: v5e:2x2
jax: 0.10.0
libtpu: 0.0.40
codegen_flags: <defaults>
</compile_context>

<pallas_src>
import functools

import jax
import jax.numpy as jnp
from jax.experimental import pallas as pl
from jax.experimental.pallas import tpu as pltpu


def object_neck_kernel(x_ref, w_pixel_ref, w_proj_ref, w_obj_ref,
                       z_g_ref, obj_val_ref, *, temp, num_heads, block_b):
    """ObjectNeck forward (mask_type='group') for a (block_b, C, HW) native-layout x tile."""
    out_c, c = w_pixel_ref.shape
    hw = x_ref.shape[-1]
    k_slots = out_c // num_heads
    c_per_head = c // num_heads
    inv_t2 = 1.0 / (temp * temp)
    inv_hw = 1.0 / hw
    # Hoisted constant (JAX does not CSE broadcasts inside the unrolled loop).
    ones_col = jnp.ones((hw, 1), dtype=x_ref.dtype)

    for t in range(block_b):                                   # static unroll over the batch sub-block
        xb = x_ref[t]                                          # (C, HW), native layout, compute dtype

        # ---- global branch: mean-pool over HW (f32 MXU accumulation) + tiny matvec -----
        x_pool = jnp.dot(xb, ones_col,
                         preferred_element_type=jnp.float32) * inv_hw        # (C, 1) f32
        z_g_ref[t] = jnp.dot(w_proj_ref[...], x_pool.astype(w_proj_ref.dtype),
                             preferred_element_type=jnp.float32)             # (OUT, 1)

        # ---- pixel branch: dominant matmul, M=OUT fills the MXU rows --------------------
        z_feat = jnp.dot(w_pixel_ref[...], xb,
                         preferred_element_type=jnp.float32)                 # (OUT, HW) f32

        # ---- F.normalize over the channel dim with both /temp folded in (EUP rsqrt) -----
        sumsq = jnp.sum(z_feat * z_feat, axis=0, keepdims=True)              # (1, HW)
        # rsqrt clamp at eps^2 keeps F.normalize(eps=1e-12) semantics (f32 math only).
        scale = jax.lax.rsqrt(jnp.maximum(sumsq, 1e-24)) * inv_t2
        attn = z_feat * scale                                                # (OUT, HW)

        # ---- softmax over spatial (lane reductions); EUP reciprocal for the denominator --
        m = jnp.max(attn, axis=-1, keepdims=True)                            # (OUT, 1)
        e = jnp.exp(attn - m)
        r = pl.reciprocal(jnp.sum(e, axis=-1, keepdims=True), approx=True)   # (OUT, 1)
        p = (e * r).astype(x_ref.dtype)                                      # (OUT, HW)

        # ---- grouped slot pooling: head-batched contraction (no block-diagonal waste) ----
        xh = xb.reshape(num_heads, c_per_head, hw)                           # (H, C/H, HW)
        ph = p.reshape(num_heads, k_slots, hw)                               # (H, K,   HW)
        obj = jnp.einsum('hcs,hks->hck', xh, ph,
                         preferred_element_type=jnp.float32)                 # (H, C/H, K) f32
        obj2 = obj.reshape(c, k_slots)                                       # (C, K)

        # ---- proj_obj (1x1 conv, no bias) ------------------------------------------------
        obj_val_ref[t] = jnp.dot(w_obj_ref[...], obj2.astype(w_obj_ref.dtype),
                                 preferred_element_type=jnp.float32)         # (OUT, K)


def object_neck_forward(x, w_proj, w_pixel, w_obj, *, num_heads=8, temp=1.1,
                        compute_dtype=jnp.bfloat16, block_b=1, vmem_limit_bytes=None):
    """Returns (z_g, obj_val, out) matching ObjectNeck.forward (group mode)."""
    b, c, h, w = x.shape
    hw = h * w
    out_c = w_proj.shape[0]
    assert out_c % num_heads == 0 and c % num_heads == 0
    assert b % block_b == 0
    k = out_c // num_heads

    # Native layout: only flatten spatial (no HBM transpose).  The bf16 cast would fuse
    # into the producing conv in a real model.
    x_flat = x.reshape(b, c, hw).astype(compute_dtype)
    w_pixel_c = w_pixel.astype(compute_dtype)      # (OUT, C), native 1x1-conv layout
    w_proj_c = w_proj.astype(compute_dtype)        # (OUT, C)
    w_obj_c = w_obj.astype(compute_dtype)          # (OUT, C)

    kernel = functools.partial(object_neck_kernel, temp=temp,
                               num_heads=num_heads, block_b=block_b)

    def build(single_buffer_weights):
        def const_spec():
            if single_buffer_weights:
                # Grid-invariant operand: double-buffering it is pure VMEM waste.
                return pl.BlockSpec((out_c, c), lambda i: (0, 0),
                                    pipeline_mode=pl.Buffered(1))
            return pl.BlockSpec((out_c, c), lambda i: (0, 0))

        compiler_kwargs = dict(dimension_semantics=("parallel",))
        if vmem_limit_bytes is not None:
            # Big-tile guidance: cap near ~48 MiB on v7x (64 MiB/TC physical),
            # raise to 64-96 MiB on v5e/v6e (128 MiB physical).
            compiler_kwargs["vmem_limit_bytes"] = vmem_limit_bytes

        return pl.pallas_call(
            kernel,
            out_shape=(jax.ShapeDtypeStruct((b, out_c, 1), jnp.float32),
                       jax.ShapeDtypeStruct((b, out_c, k), jnp.float32)),
            grid_spec=pltpu.PrefetchScalarGridSpec(
                num_scalar_prefetch=0,
                grid=(b // block_b,),
                in_specs=[
                    pl.BlockSpec((block_b, c, hw), lambda i: (i, 0, 0)),  # x (native layout)
                    const_spec(),                                         # W_pixel
                    const_spec(),                                         # W_proj
                    const_spec(),                                         # W_obj
                ],
                out_specs=[
                    pl.BlockSpec((block_b, out_c, 1), lambda i: (i, 0, 0)),  # z_g
                    pl.BlockSpec((block_b, out_c, k), lambda i: (i, 0, 0)),  # obj_val
                ],
            ),
            compiler_params=pltpu.CompilerParams(**compiler_kwargs),
        )

    args = (x_flat, w_pixel_c, w_proj_c, w_obj_c)
    try:
        z_g, obj_val = build(single_buffer_weights=True)(*args)
        jax.block_until_ready((z_g, obj_val))
    except Exception:  # pragma: no cover - pipeliners that reject Buffered(1) fall back here.
        z_g, obj_val = build(single_buffer_weights=False)(*args)

    # mask_type='group' path leaves `out` empty in the PyTorch code.
    return z_g, obj_val, {}


def reference_forward(x, w_proj, w_pixel, w_obj, *, num_heads=8, temp=1.1):
    """Pure-JAX f32 reference mirroring the PyTorch forward (group mode)."""
    b, c, h, w = x.shape
    hw = h * w
    xf = x.reshape(b, c, hw).astype(jnp.float32)
    out_c = w_proj.shape[0]
    K = out_c // num_heads

    x_pool = jnp.mean(xf, axis=2, keepdims=True)                    # (b, c, 1)
    z_g = jnp.einsum('oc,bcl->bol', w_proj, x_pool)                 # (b, OUT, 1)
    z_feat = jnp.einsum('oc,bcl->bol', w_pixel, xf)                 # (b, OUT, HW)

    norm = jnp.sqrt(jnp.sum(z_feat * z_feat, axis=1, keepdims=True))
    attn = z_feat / jnp.maximum(norm, 1e-12)
    attn = attn / temp
    attn = attn.reshape(b, num_heads, K, hw)
    attn = jax.nn.softmax(attn / temp, axis=-1)

    xh = xf.reshape(b, num_heads, c // num_heads, hw)
    obj = jnp.einsum('bhcs,bhks->bhck', xh, attn).reshape(b, c, K)
    obj_val = jnp.einsum('oc,bck->bok', w_obj, obj)
    return z_g, obj_val


if __name__ == "__main__":
    # Small shapes consistent with the module: b=2, in_channels=32 (divisible by
    # num_heads=8), out_channels=32, spatial 8x8.
    b, c, h, w = 2, 32, 8, 8
    out_channels = 32
    num_heads = 8
    temp = 1.1

    key = jax.random.PRNGKey(0)
    kx, kp, kpix, kobj = jax.random.split(key, 4)

    x = jax.random.normal(kx, (b, c, h, w), dtype=jnp.float32)
    wscale = 1.0 / (c ** 0.5)
    w_proj = jax.random.normal(kp, (out_channels, c), dtype=jnp.float32) * wscale
    w_pixel = jax.random.normal(kpix, (out_channels, c), dtype=jnp.float32) * wscale
    w_obj = jax.random.normal(kobj, (out_channels, c), dtype=jnp.float32) * wscale

    # Default path (bf16 operands, f32 accumulation).
    z_g_bf16, obj_val_bf16, out = object_neck_forward(
        x, w_proj, w_pixel, w_obj, num_heads=num_heads, temp=temp)
    # f32 path for a tight numerics check.
    z_g_f32, obj_val_f32, _ = object_neck_forward(
        x, w_proj, w_pixel, w_obj, num_heads=num_heads, temp=temp,
        compute_dtype=jnp.float32)
    jax.block_until_ready((z_g_bf16, obj_val_bf16, z_g_f32, obj_val_f32))

    z_g_ref, obj_val_ref = reference_forward(
        x, w_proj, w_pixel, w_obj, num_heads=num_heads, temp=temp)

    assert z_g_f32.shape == (b, out_channels, 1)
    assert obj_val_f32.shape == (b, out_channels, out_channels // num_heads)
    assert z_g_bf16.shape == z_g_f32.shape and obj_val_bf16.shape == obj_val_f32.shape
    assert isinstance(out, dict) and not out

    # f32 path: only the EUP approximate reciprocal / rsqrt differ from the reference.
    assert jnp.allclose(z_g_f32, z_g_ref, rtol=1e-3, atol=1e-3)
    assert jnp.allclose(obj_val_f32, obj_val_ref, rtol=2e-3, atol=2e-3)
    # bf16 path: operands are quantized before the MXU, so tolerances are loosened.
    assert jnp.allclose(z_g_bf16, z_g_ref, rtol=5e-2, atol=2e-2)
    assert jnp.allclose(obj_val_bf16, obj_val_ref, rtol=5e-2, atol=2e-2)

    print("KERNEL_OK")
</pallas_src>

<mosaic_0001>
module attributes {stable_mosaic.version = 11 : i64} {
  func.func @object_neck_kernel(%arg0: i32, %arg1: memref<1x32x64xbf16, #tpu.memory_space<vmem>>, %arg2: memref<32x32xbf16, #tpu.memory_space<vmem>>, %arg3: memref<32x32xbf16, #tpu.memory_space<vmem>>, %arg4: memref<32x32xbf16, #tpu.memory_space<vmem>>, %arg5: memref<1x32x1xf32, #tpu.memory_space<vmem>>, %arg6: memref<1x32x4xf32, #tpu.memory_space<vmem>>) attributes {dimension_semantics = [#tpu.dimension_semantics<parallel>], iteration_bounds = array<i64: 2>, scalar_prefetch = 0 : i64, scratch_operands = 0 : i64, tpu.core_type = #tpu.core_type<tc>, window_params = [{transform_indices = @transform_0, window_bounds = array<i64: 1, 32, 64>}, {pipeline_mode = #tpu.pipeline_mode<synchronous>, transform_indices = @transform_1, window_bounds = array<i64: 32, 32>}, {pipeline_mode = #tpu.pipeline_mode<synchronous>, transform_indices = @transform_2, window_bounds = array<i64: 32, 32>}, {pipeline_mode = #tpu.pipeline_mode<synchronous>, transform_indices = @transform_3, window_bounds = array<i64: 32, 32>}, {transform_indices = @transform_4, window_bounds = array<i64: 1, 32, 1>}, {transform_indices = @transform_5, window_bounds = array<i64: 1, 32, 4>}]} {
    %cst = arith.constant 1.000000e+00 : bf16
    %0 = vector.broadcast %cst : bf16 to vector<64x1xbf16>
    %c0 = arith.constant 0 : index
    %c0_0 = arith.constant 0 : index
    %c0_1 = arith.constant 0 : index
    %1 = vector.load %arg1[%c0, %c0_0, %c0_1] : memref<1x32x64xbf16, #tpu.memory_space<vmem>>, vector<1x32x64xbf16>
    %2 = vector.shape_cast %1 : vector<1x32x64xbf16> to vector<32x64xbf16>
    %cst_2 = arith.constant dense<0.000000e+00> : vector<32x1xf32>
    %3 = tpu.matmul %2, %0, %cst_2 {dimension_numbers = #tpu.dot_dimension_numbers<[1], [0], [0], [1], [0, 0, 1, 1], [], []>} : vector<32x64xbf16>, vector<64x1xbf16>, vector<32x1xf32> -> vector<32x1xf32>
    %cst_3 = arith.constant 1.562500e-02 : f32
    %4 = vector.broadcast %cst_3 : f32 to vector<32x1xf32>
    %5 = arith.mulf %3, %4 : vector<32x1xf32>
    %c0_4 = arith.constant 0 : index
    %c0_5 = arith.constant 0 : index
    %6 = vector.load %arg3[%c0_4, %c0_5] : memref<32x32xbf16, #tpu.memory_space<vmem>>, vector<32x32xbf16>
    %7 = arith.truncf %5 : vector<32x1xf32> to vector<32x1xbf16>
    %cst_6 = arith.constant dense<0.000000e+00> : vector<32x1xf32>
    %8 = tpu.matmul %6, %7, %cst_6 {dimension_numbers = #tpu.dot_dimension_numbers<[1], [0], [0], [1], [0, 0, 1, 1], [], []>} : vector<32x32xbf16>, vector<32x1xbf16>, vector<32x1xf32> -> vector<32x1xf32>
    %c0_7 = arith.constant 0 : index
    %c0_8 = arith.constant 0 : index
    %c0_9 = arith.constant 0 : index
    %9 = vector.load %arg5[%c0_7, %c0_8, %c0_9] : memref<1x32x1xf32, #tpu.memory_space<vmem>>, vector<1x32x1xf32>
    %10 = vector.shape_cast %9 : vector<1x32x1xf32> to vector<32x1xf32>
    %11 = vector.shape_cast %8 : vector<32x1xf32> to vector<1x32x1xf32>
    tpu.vector_store %arg5[%c0_7, %c0_8, %c0_9], %11 {strides = array<i32>} : memref<1x32x1xf32, #tpu.memory_space<vmem>>, vector<1x32x1xf32>,
    %c0_10 = arith.constant 0 : index
    %c0_11 = arith.constant 0 : index
    %12 = vector.load %arg2[%c0_10, %c0_11] : memref<32x32xbf16, #tpu.memory_space<vmem>>, vector<32x32xbf16>
    %cst_12 = arith.constant dense<0.000000e+00> : vector<32x64xf32>
    %13 = tpu.matmul %12, %2, %cst_12 {dimension_numbers = #tpu.dot_dimension_numbers<[1], [0], [0], [1], [0, 0, 1, 1], [], []>} : vector<32x32xbf16>, vector<32x64xbf16>, vector<32x64xf32> -> vector<32x64xf32>
    %14 = arith.mulf %13, %13 : vector<32x64xf32>
    %cst_13 = arith.constant dense<0.000000e+00> : vector<64xf32>
    %15 = vector.multi_reduction <add>, %14, %cst_13 [0] : vector<32x64xf32> to vector<64xf32>
    %16 = vector.shape_cast %15 : vector<64xf32> to vector<1x64xf32>
    %cst_14 = arith.constant 1.000000e-24 : f32
    %17 = vector.broadcast %cst_14 : f32 to vector<1x64xf32>
    %18 = arith.maximumf %16, %17 : vector<1x64xf32>
    %19 = math.rsqrt %18 : vector<1x64xf32>
    %cst_15 = arith.constant 0.826446295 : f32
    %20 = vector.broadcast %cst_15 : f32 to vector<1x64xf32>
    %21 = arith.mulf %19, %20 : vector<1x64xf32>
    %22 = vector.broadcast %21 : vector<1x64xf32> to vector<32x64xf32>
    %23 = arith.mulf %13, %22 : vector<32x64xf32>
    %cst_16 = arith.constant dense<0xFF800000> : vector<32xf32>
    %24 = vector.multi_reduction <maximumf>, %23, %cst_16 [1] : vector<32x64xf32> to vector<32xf32>
    %25 = vector.shape_cast %24 : vector<32xf32> to vector<32x1xf32>
    %26 = vector.broadcast %25 : vector<32x1xf32> to vector<32x64xf32>
    %27 = arith.subf %23, %26 : vector<32x64xf32>
    %28 = math.exp %27 : vector<32x64xf32>
    %cst_17 = arith.constant dense<0.000000e+00> : vector<32xf32>
    %29 = vector.multi_reduction <add>, %28, %cst_17 [1] : vector<32x64xf32> to vector<32xf32>
    %30 = vector.shape_cast %29 : vector<32xf32> to vector<32x1xf32>
    %31 = tpu.reciprocal %30 {approx = true} : vector<32x1xf32> -> vector<32x1xf32>
    %32 = vector.broadcast %31 : vector<32x1xf32> to vector<32x64xf32>
    %33 = arith.mulf %28, %32 : vector<32x64xf32>
    %34 = arith.truncf %33 : vector<32x64xf32> to vector<32x64xbf16>
    %35 = vector.shape_cast %2 : vector<32x64xbf16> to vector<8x4x64xbf16>
    %36 = vector.shape_cast %34 : vector<32x64xbf16> to vector<8x4x64xbf16>
    "tpu.trace_start"() <{level = 10 : i32, message = "hcs,hks->hck"}> : () -> ()
    %cst_18 = arith.constant dense<0.000000e+00> : vector<8x4x4xf32>
    %37 = tpu.matmul %35, %36, %cst_18 {dimension_numbers = #tpu.dot_dimension_numbers<[2], [2], [1], [1], [0, 0, 0, 1, 1, 1], [0], [0]>} : vector<8x4x64xbf16>, vector<8x4x64xbf16>, vector<8x4x4xf32> -> vector<8x4x4xf32>
    "tpu.trace_stop"() : () -> ()
    %38 = vector.shape_cast %37 : vector<8x4x4xf32> to vector<32x4xf32>
    %c0_19 = arith.constant 0 : index
    %c0_20 = arith.constant 0 : index
    %39 = vector.load %arg4[%c0_19, %c0_20] : memref<32x32xbf16, #tpu.memory_space<vmem>>, vector<32x32xbf16>
    %40 = arith.truncf %38 : vector<32x4xf32> to vector<32x4xbf16>
    %cst_21 = arith.constant dense<0.000000e+00> : vector<32x4xf32>
    %41 = tpu.matmul %39, %40, %cst_21 {dimension_numbers = #tpu.dot_dimension_numbers<[1], [0], [0], [1], [0, 0, 1, 1], [], []>} : vector<32x32xbf16>, vector<32x4xbf16>, vector<32x4xf32> -> vector<32x4xf32>
    %c0_22 = arith.constant 0 : index
    %c0_23 = arith.constant 0 : index
    %c0_24 = arith.constant 0 : index
    %42 = vector.load %arg6[%c0_22, %c0_23, %c0_24] : memref<1x32x4xf32, #tpu.memory_space<vmem>>, vector<1x32x4xf32>
    %43 = vector.shape_cast %42 : vector<1x32x4xf32> to vector<32x4xf32>
    %44 = vector.shape_cast %41 : vector<32x4xf32> to vector<1x32x4xf32>
    tpu.vector_store %arg6[%c0_22, %c0_23, %c0_24], %44 {strides = array<i32>} : memref<1x32x4xf32, #tpu.memory_space<vmem>>, vector<1x32x4xf32>,
    return
  }
  func.func @transform_0(%arg0: i32) -> (i32, i32, i32) {
    %c0_i32 = arith.constant 0 : i32
    %c0_i32_0 = arith.constant 0 : i32
    %c0_i32_1 = arith.constant 0 : i32
    return %arg0, %c0_i32, %c0_i32_0 : i32, i32, i32
  }
  func.func @transform_1(%arg0: i32) -> (i32, i32) {
    %c0_i32 = arith.constant 0 : i32
    %c0_i32_0 = arith.constant 0 : i32
    %c0_i32_1 = arith.constant 0 : i32
    return %c0_i32, %c0_i32_0 : i32, i32
  }
  func.func @transform_2(%arg0: i32) -> (i32, i32) {
    %c0_i32 = arith.constant 0 : i32
    %c0_i32_0 = arith.constant 0 : i32
    %c0_i32_1 = arith.constant 0 : i32
    return %c0_i32, %c0_i32_0 : i32, i32
  }
  func.func @transform_3(%arg0: i32) -> (i32, i32) {
    %c0_i32 = arith.constant 0 : i32
    %c0_i32_0 = arith.constant 0 : i32
    %c0_i32_1 = arith.constant 0 : i32
    return %c0_i32, %c0_i32_0 : i32, i32
  }
  func.func @transform_4(%arg0: i32) -> (i32, i32, i32) {
    %c0_i32 = arith.constant 0 : i32
    %c0_i32_0 = arith.constant 0 : i32
    %c0_i32_1 = arith.constant 0 : i32
    return %arg0, %c0_i32, %c0_i32_0 : i32, i32, i32
  }
  func.func @transform_5(%arg0: i32) -> (i32, i32, i32) {
    %c0_i32 = arith.constant 0 : i32
    %c0_i32_0 = arith.constant 0 : i32
    %c0_i32_1 = arith.constant 0 : i32
    return %arg0, %c0_i32, %c0_i32_0 : i32, i32, i32
  }
}

module attributes {stable_mosaic.version = 11 : i64} {
  func.func @object_neck_kernel(%arg0: i32, %arg1: memref<1x32x64xbf16, #tpu.memory_space<vmem>>, %arg2: memref<32x32xbf16, #tpu.memory_space<vmem>>, %arg3: memref<32x32xbf16, #tpu.memory_space<vmem>>, %arg4: memref<32x32xbf16, #tpu.memory_space<vmem>>, %arg5: memref<1x32x1xf32, #tpu.memory_space<vmem>>, %arg6: memref<1x32x4xf32, #tpu.memory_space<vmem>>) attributes {dimension_semantics = [#tpu.dimension_semantics<parallel>], iteration_bounds = array<i64: 2>, scalar_prefetch = 0 : i64, scratch_operands = 0 : i64, tpu.core_type = #tpu.core_type<tc>, window_params = [{transform_indices = @transform_0, window_bounds = array<i64: 1, 32, 64>}, {pipeline_mode = #tpu.pipeline_mode<synchronous>, transform_indices = @transform_1, window_bounds = array<i64: 32, 32>}, {pipeline_mode = #tpu.pipeline_mode<synchronous>, transform_indices = @transform_2, window_bounds = array<i64: 32, 32>}, {pipeline_mode = #tpu.pipeline_mode<synchronous>, transform_indices = @transform_3, window_bounds = array<i64: 32, 32>}, {transform_indices = @transform_4, window_bounds = array<i64: 1, 32, 1>}, {transform_indices = @transform_5, window_bounds = array<i64: 1, 32, 4>}]} {
    %cst = arith.constant 1.000000e+00 : bf16
    %0 = vector.broadcast %cst : bf16 to vector<64x1xbf16>
    %c0 = arith.constant 0 : index
    %c0_0 = arith.constant 0 : index
    %c0_1 = arith.constant 0 : index
    %1 = vector.load %arg1[%c0, %c0_0, %c0_1] : memref<1x32x64xbf16, #tpu.memory_space<vmem>>, vector<1x32x64xbf16>
    %2 = vector.shape_cast %1 : vector<1x32x64xbf16> to vector<32x64xbf16>
    %cst_2 = arith.constant dense<0.000000e+00> : vector<32x1xf32>
    %3 = tpu.matmul %2, %0, %cst_2 {dimension_numbers = #tpu.dot_dimension_numbers<[1], [0], [0], [1], [0, 0, 1, 1], [], []>} : vector<32x64xbf16>, vector<64x1xbf16>, vector<32x1xf32> -> vector<32x1xf32>
    %cst_3 = arith.constant 1.562500e-02 : f32
    %4 = vector.broadcast %cst_3 : f32 to vector<32x1xf32>
    %5 = arith.mulf %3, %4 : vector<32x1xf32>
    %c0_4 = arith.constant 0 : index
    %c0_5 = arith.constant 0 : index
    %6 = vector.load %arg3[%c0_4, %c0_5] : memref<32x32xbf16, #tpu.memory_space<vmem>>, vector<32x32xbf16>
    %7 = arith.truncf %5 : vector<32x1xf32> to vector<32x1xbf16>
    %cst_6 = arith.constant dense<0.000000e+00> : vector<32x1xf32>
    %8 = tpu.matmul %6, %7, %cst_6 {dimension_numbers = #tpu.dot_dimension_numbers<[1], [0], [0], [1], [0, 0, 1, 1], [], []>} : vector<32x32xbf16>, vector<32x1xbf16>, vector<32x1xf32> -> vector<32x1xf32>
    %c0_7 = arith.constant 0 : index
    %c0_8 = arith.constant 0 : index
    %c0_9 = arith.constant 0 : index
    %9 = vector.load %arg5[%c0_7, %c0_8, %c0_9] : memref<1x32x1xf32, #tpu.memory_space<vmem>>, vector<1x32x1xf32>
    %10 = vector.shape_cast %9 : vector<1x32x1xf32> to vector<32x1xf32>
    %11 = vector.shape_cast %8 : vector<32x1xf32> to vector<1x32x1xf32>
    tpu.vector_store %arg5[%c0_7, %c0_8, %c0_9], %11 {strides = array<i32>} : memref<1x32x1xf32, #tpu.memory_space<vmem>>, vector<1x32x1xf32>,
    %c0_10 = arith.constant 0 : index
    %c0_11 = arith.constant 0 : index
    %12 = vector.load %arg2[%c0_10, %c0_11] : memref<32x32xbf16, #tpu.memory_space<vmem>>, vector<32x32xbf16>
    %cst_12 = arith.constant dense<0.000000e+00> : vector<32x64xf32>
    %13 = tpu.matmul %12, %2, %cst_12 {dimension_numbers = #tpu.dot_dimension_numbers<[1], [0], [0], [1], [0, 0, 1, 1], [], []>} : vector<32x32xbf16>, vector<32x64xbf16>, vector<32x64xf32> -> vector<32x64xf32>
    %14 = arith.mulf %13, %13 : vector<32x64xf32>
    %cst_13 = arith.constant dense<0.000000e+00> : vector<64xf32>
    %15 = vector.multi_reduction <add>, %14, %cst_13 [0] : vector<32x64xf32> to vector<64xf32>
    %16 = vector.shape_cast %15 : vector<64xf32> to vector<1x64xf32>
    %cst_14 = arith.constant 1.000000e-24 : f32
    %17 = vector.broadcast %cst_14 : f32 to vector<1x64xf32>
    %18 = arith.maximumf %16, %17 : vector<1x64xf32>
    %19 = math.rsqrt %18 : vector<1x64xf32>
    %cst_15 = arith.constant 0.826446295 : f32
    %20 = vector.broadcast %cst_15 : f32 to vector<1x64xf32>
    %21 = arith.mulf %19, %20 : vector<1x64xf32>
    %22 = vector.broadcast %21 : vector<1x64xf32> to vector<32x64xf32>
    %23 = arith.mulf %13, %22 : vector<32x64xf32>
    %cst_16 = arith.constant dense<0xFF800000> : vector<32xf32>
    %24 = vector.multi_reduction <maximumf>, %23, %cst_16 [1] : vector<32x64xf32> to vector<32xf32>
    %25 = vector.shape_cast %24 : vector<32xf32> to vector<32x1xf32>
    %26 = vector.broadcast %25 : vector<32x1xf32> to vector<32x64xf32>
    %27 = arith.subf %23, %26 : vector<32x64xf32>
    %28 = math.exp %27 : vector<32x64xf32>
    %cst_17 = arith.constant dense<0.000000e+00> : vector<32xf32>
    %29 = vector.multi_reduction <add>, %28, %cst_17 [1] : vector<32x64xf32> to vector<32xf32>
    %30 = vector.shape_cast %29 : vector<32xf32> to vector<32x1xf32>
    %31 = tpu.reciprocal %30 {approx = true} : vector<32x1xf32> -> vector<32x1xf32>
    %32 = vector.broadcast %31 : vector<32x1xf32> to vector<32x64xf32>
    %33 = arith.mulf %28, %32 : vector<32x64xf32>
    %34 = arith.truncf %33 : vector<32x64xf32> to vector<32x64xbf16>
    %35 = vector.shape_cast %2 : vector<32x64xbf16> to vector<8x4x64xbf16>
    %36 = vector.shape_cast %34 : vector<32x64xbf16> to vector<8x4x64xbf16>
    "tpu.trace_start"() <{level = 10 : i32, message = "hcs,hks->hck"}> : () -> ()
    %cst_18 = arith.constant dense<0.000000e+00> : vector<8x4x4xf32>
    %37 = tpu.matmul %35, %36, %cst_18 {dimension_numbers = #tpu.dot_dimension_numbers<[2], [2], [1], [1], [0, 0, 0, 1, 1, 1], [0], [0]>} : vector<8x4x64xbf16>, vector<8x4x64xbf16>, vector<8x4x4xf32> -> vector<8x4x4xf32>
    "tpu.trace_stop"() : () -> ()
    %38 = vector.shape_cast %37 : vector<8x4x4xf32> to vector<32x4xf32>
    %c0_19 = arith.constant 0 : index
    %c0_20 = arith.constant 0 : index
    %39 = vector.load %arg4[%c0_19, %c0_20] : memref<32x32xbf16, #tpu.memory_space<vmem>>, vector<32x32xbf16>
    %40 = arith.truncf %38 : vector<32x4xf32> to vector<32x4xbf16>
    %cst_21 = arith.constant dense<0.000000e+00> : vector<32x4xf32>
    %41 = tpu.matmul %39, %40, %cst_21 {dimension_numbers = #tpu.dot_dimension_numbers<[1], [0], [0], [1], [0, 0, 1, 1], [], []>} : vector<32x32xbf16>, vector<32x4xbf16>, vector<32x4xf32> -> vector<32x4xf32>
    %c0_22 = arith.constant 0 : index
    %c0_23 = arith.constant 0 : index
    %c0_24 = arith.constant 0 : index
    %42 = vector.load %arg6[%c0_22, %c0_23, %c0_24] : memref<1x32x4xf32, #tpu.memory_space<vmem>>, vector<1x32x4xf32>
    %43 = vector.shape_cast %42 : vector<1x32x4xf32> to vector<32x4xf32>
    %44 = vector.shape_cast %41 : vector<32x4xf32> to vector<1x32x4xf32>
    tpu.vector_store %arg6[%c0_22, %c0_23, %c0_24], %44 {strides = array<i32>} : memref<1x32x4xf32, #tpu.memory_space<vmem>>, vector<1x32x4xf32>,
    return
  }
  func.func @transform_0(%arg0: i32) -> (i32, i32, i32) {
    %c0_i32 = arith.constant 0 : i32
    %c0_i32_0 = arith.constant 0 : i32
    %c0_i32_1 = arith.constant 0 : i32
    return %arg0, %c0_i32, %c0_i32_0 : i32, i32, i32
  }
  func.func @transform_1(%arg0: i32) -> (i32, i32) {
    %c0_i32 = arith.constant 0 : i32
    %c0_i32_0 = arith.constant 0 : i32
    %c0_i32_1 = arith.constant 0 : i32
    return %c0_i32, %c0_i32_0 : i32, i32
  }
  func.func @transform_2(%arg0: i32) -> (i32, i32) {
    %c0_i32 = arith.constant 0 : i32
    %c0_i32_0 = arith.constant 0 : i32
    %c0_i32_1 = arith.constant 0 : i32
    return %c0_i32, %c0_i32_0 : i32, i32
  }
  func.func @transform_3(%arg0: i32) -> (i32, i32) {
    %c0_i32 = arith.constant 0 : i32
    %c0_i32_0 = arith.constant 0 : i32
    %c0_i32_1 = arith.constant 0 : i32
    return %c0_i32, %c0_i32_0 : i32, i32
  }
  func.func @transform_4(%arg0: i32) -> (i32, i32, i32) {
    %c0_i32 = arith.constant 0 : i32
    %c0_i32_0 = arith.constant 0 : i32
    %c0_i32_1 = arith.constant 0 : i32
    return %arg0, %c0_i32, %c0_i32_0 : i32, i32, i32
  }
  func.func @transform_5(%arg0: i32) -> (i32, i32, i32) {
    %c0_i32 = arith.constant 0 : i32
    %c0_i32_0 = arith.constant 0 : i32
    %c0_i32_1 = arith.constant 0 : i32
    return %arg0, %c0_i32, %c0_i32_0 : i32, i32, i32
  }
}

</mosaic_0001>

<llo_original>
// kernel: tpu_custom_call.1
$region0: #{tpu_custom_call.1}
  #allocation0 [shape = 'u32[]', space=smem, size = 0x4, offset = 0x4, fixed_abs, tag = 'smem constant byte address 0x4 - core index']
  #allocation1 [shape = 'u32[72,128]{1,0:T(1,128)}', space=vmem, size = 0x9000, scoped, tag = 'internal scratch']
  %s0 = inlined_call_operand.hbm [shape: bf16[2,32,64], index: 0, kind: input, shape index: {}]
  %s1 = inlined_call_operand.hbm [shape: bf16[32,32], index: 1, kind: input, shape index: {}]
  %s2 = inlined_call_operand.hbm [shape: bf16[32,32], index: 2, kind: input, shape index: {}]
  %s3 = inlined_call_operand.hbm [shape: bf16[32,32], index: 3, kind: input, shape index: {}]
  %s4 = inlined_call_operand.vmem [shape: f32[2,32,1], index: 4, kind: output, shape index: {0}]
  %s5 = inlined_call_operand.vmem [shape: f32[2,32,4], index: 5, kind: output, shape index: {1}]
  %6 = xla_tuple %s4, %s5
  %s7 = sld [smem:[#allocation0]]
  $region73: #{tpu_custom_call.1} parent=0
    _
  %s9 = ssub.s32 1, %s7
  %s10 = scalar_select 0, %s9, %s7
  $region1: #{tpu_custom_call.1} parent=0
    #allocation2 [shape = 'u8[16384]{0}', space=vmem, size = 0x4000, scoped, tag = 'input window, operand 0']
    #allocation3 [shape = 's32[2]{0}', space=sflag, size = 0x8, scoped, tag = 'scoped memory for tpu_custom_call.1']
    #allocation4 [shape = 'u8[8192]{0}', space=vmem, size = 0x2000, scoped, tag = 'input window, operand 1, single buffered']
    #allocation5 [shape = 's32[1]{0}', space=sflag, size = 0x4, scoped, tag = 'scoped memory for tpu_custom_call.1']
    #allocation6 [shape = 'u8[8192]{0}', space=vmem, size = 0x2000, scoped, tag = 'input window, operand 2, single buffered']
    #allocation7 [shape = 'u8[8192]{0}', space=vmem, size = 0x2000, scoped, tag = 'input window, operand 3, single buffered']
    #allocation8 [shape = 's32[1]{0}', space=sflag, size = 0x4, scoped, tag = 'scoped memory for tpu_custom_call.1']
    %11 = vsyncpa [#allocation3], 0
    %s12 = scalar_lea.sflag [#allocation3], 1
    %13 = vsyncpa %s12, 0
    %14 = vsyncpa [#allocation5], 0
    %15 = vsyncpa [#allocation8], 0
    loop: start=0, step=1, limit=4
    $region2: #{tpu_custom_call.1} parent=1 // loop_pre_header
      _
    $region3: #{tpu_custom_call.1} parent=1 // loop_header
      %s17 = sphi 0, %s21
      %p18 = scmp.ge.s32.totalorder %s17, 4
      %s27 = sphi 0, %s29
      %s30 = sphi 0, %s27
      %s31 = sphi 0, %s30
      %s47 = sphi 0, %s31
      %s51 = sphi 0, %s51
      %s53 = sphi 0, %s51
      %s54 = sphi 0, %s53
      %s68 = sphi 0, %s54
      %s72 = sphi 0, %s72
      %s74 = sphi 0, %s72
      %s75 = sphi 0, %s74
      %s89 = sphi 0, %s75
      %s93 = sphi 0, %s93
      %s95 = sphi 0, %s93
      %s96 = sphi 0, %s95
      %s110 = sphi 0, %s96
      %s116 = sphi 0, %s118
      %s119 = sphi 0, %s116
      %s120 = sphi 0, %s119
      %s136 = sphi 0, %s120
      %s142 = sphi 0, %s144
      %s145 = sphi 0, %s142
      %s146 = sphi 0, %s145
      %s162 = sphi 0, %s146
    $region4: #{tpu_custom_call.1} parent=1 // loop_header_branch
      %20 = sbr.rel (%p18) target = $region8
    $region5: #{tpu_custom_call.1} parent=1 // loop_body
      %s22 = ssub.s32 %s17, 1
      %s23 = ssub.s32 %s17, 2
      %s24 = sadd.s32 %s17, 1
      %s25 = ssub.s32 %s17, %s24
      %p26 = scmp.eq.s32.totalorder %s25, 0
      %s28 = sadd.s32 %s27, 1
      %s29 = scalar_select %p26, %s27, %s28
      %p32 = pneg %p26
      %p33 = scmp.eq.s32.totalorder %s17, 1
      %p34 = por %p32, %p33
      %p35 = scmp.ne.s32.totalorder %s27, %s30
      %p36 = scmp.eq.s32.totalorder %s17, 0
      %p37 = por %p35, %p36
      %p38 = scmp.ne.s32.totalorder %s27, %s30
      %p39 = scmp.eq.s32.totalorder %s22, 1
      %p40 = por %p38, %p39
      %p41 = scmp.ne.s32.totalorder %s30, %s31
      %p42 = scmp.eq.s32.totalorder %s22, 0
      %p43 = por %p41, %p42
      %p44 = scmp.ne.s32.totalorder %s30, %s31
      %p45 = scmp.eq.s32.totalorder %s23, 1
      %p46 = por %p44, %p45
      %p48 = scmp.ne.s32.totalorder %s31, %s47
      %p49 = scmp.eq.s32.totalorder %s23, 0
      %p50 = por %p48, %p49
      %s52 = sadd.s32 %s51, 1
      %p55 = scmp.eq.s32.totalorder %s17, 1
      %p56 = scmp.ne.s32.totalorder %s51, %s53
      %p57 = scmp.eq.s32.totalorder %s17, 0
      %p58 = por %p56, %p57
      %p59 = scmp.ne.s32.totalorder %s51, %s53
      %p60 = scmp.eq.s32.totalorder %s22, 1
      %p61 = por %p59, %p60
      %p62 = scmp.ne.s32.totalorder %s53, %s54
      %p63 = scmp.eq.s32.totalorder %s22, 0
      %p64 = por %p62, %p63
      %p65 = scmp.ne.s32.totalorder %s53, %s54
      %p66 = scmp.eq.s32.totalorder %s23, 1
      %p67 = por %p65, %p66
      %p69 = scmp.ne.s32.totalorder %s54, %s68
      %p70 = scmp.eq.s32.totalorder %s23, 0
      %p71 = por %p69, %p70
      %s73 = sadd.s32 %s72, 1
      %p76 = scmp.eq.s32.totalorder %s17, 1
      %p77 = scmp.ne.s32.totalorder %s72, %s74
      %p78 = scmp.eq.s32.totalorder %s17, 0
      %p79 = por %p77, %p78
      %p80 = scmp.ne.s32.totalorder %s72, %s74
      %p81 = scmp.eq.s32.totalorder %s22, 1
      %p82 = por %p80, %p81
      %p83 = scmp.ne.s32.totalorder %s74, %s75
      %p84 = scmp.eq.s32.totalorder %s22, 0
      %p85 = por %p83, %p84
      %p86 = scmp.ne.s32.totalorder %s74, %s75
      %p87 = scmp.eq.s32.totalorder %s23, 1
      %p88 = por %p86, %p87
      %p90 = scmp.ne.s32.totalorder %s75, %s89
      %p91 = scmp.eq.s32.totalorder %s23, 0
      %p92 = por %p90, %p91
      %s94 = sadd.s32 %s93, 1
      %p97 = scmp.eq.s32.totalorder %s17, 1
      %p98 = scmp.ne.s32.totalorder %s93, %s95
      %p99 = scmp.eq.s32.totalorder %s17, 0
      %p100 = por %p98, %p99
      %p101 = scmp.ne.s32.totalorder %s93, %s95
      %p102 = scmp.eq.s32.totalorder %s22, 1
      %p103 = por %p101, %p102
      %p104 = scmp.ne.s32.totalorder %s95, %s96
      %p105 = scmp.eq.s32.totalorder %s22, 0
      %p106 = por %p104, %p105
      %p107 = scmp.ne.s32.totalorder %s95, %s96
      %p108 = scmp.eq.s32.totalorder %s23, 1
      %p109 = por %p107, %p108
      %p111 = scmp.ne.s32.totalorder %s96, %s110
      %p112 = scmp.eq.s32.totalorder %s23, 0
      %p113 = por %p111, %p112
      %s114 = ssub.s32 %s17, %s24
      %p115 = scmp.eq.s32.totalorder %s114, 0
      %s117 = sadd.s32 %s116, 1
      %s118 = scalar_select %p115, %s116, %s117
      %p121 = pneg %p115
      %p122 = scmp.eq.s32.totalorder %s17, 1
      %p123 = por %p121, %p122
      %p124 = scmp.ne.s32.totalorder %s116, %s119
      %p125 = scmp.eq.s32.totalorder %s17, 0
      %p126 = por %p124, %p125
      %p127 = scmp.ne.s32.totalorder %s116, %s119
      %p128 = scmp.eq.s32.totalorder %s22, 1
      %p129 = por %p127, %p128
      %p130 = scmp.ne.s32.totalorder %s119, %s120
      %p131 = scmp.eq.s32.totalorder %s22, 0
      %p132 = por %p130, %p131
      %p133 = scmp.ne.s32.totalorder %s119, %s120
      %p134 = scmp.eq.s32.totalorder %s23, 1
      %p135 = por %p133, %p134
      %p137 = scmp.ne.s32.totalorder %s120, %s136
      %p138 = scmp.eq.s32.totalorder %s23, 0
      %p139 = por %p137, %p138
      %s140 = ssub.s32 %s17, %s24
      %p141 = scmp.eq.s32.totalorder %s140, 0
      %s143 = sadd.s32 %s142, 1
      %s144 = scalar_select %p141, %s142, %s143
      %p147 = pneg %p141
      %p148 = scmp.eq.s32.totalorder %s17, 1
      %p149 = por %p147, %p148
      %p150 = scmp.ne.s32.totalorder %s142, %s145
      %p151 = scmp.eq.s32.totalorder %s17, 0
      %p152 = por %p150, %p151
      %p153 = scmp.ne.s32.totalorder %s142, %s145
      %p154 = scmp.eq.s32.totalorder %s22, 1
      %p155 = por %p153, %p154
      %p156 = scmp.ne.s32.totalorder %s145, %s146
      %p157 = scmp.eq.s32.totalorder %s22, 0
      %p158 = por %p156, %p157
      %p159 = scmp.ne.s32.totalorder %s145, %s146
      %p160 = scmp.eq.s32.totalorder %s23, 1
      %p161 = por %p159, %p160
      %p163 = scmp.ne.s32.totalorder %s146, %s162
      %p164 = scmp.eq.s32.totalorder %s23, 0
      %p165 = por %p163, %p164
      %p166 = scmp.le.s32.totalorder 1, %s17
      %p167 = scmp.lt.s32.totalorder %s17, 3
      %p168 = pnand %p166, %p167
      %p169 = pneg %p168
      // Predicated region
      $region9: #{tpu_custom_call.1} parent=5 // pred_check
        _
      $region10: #{tpu_custom_call.1} parent=5 // pred_check_branch
        %171 = sbr.rel (%p168) target = $region12
      $region11: #{tpu_custom_call.1} parent=5 // pred_region
        %s172 = ssub.s32 %s17, 1
        // Predicated region
        $region13: #{tpu_custom_call.1} parent=11 // pred_check
          %p173 = pneg %p64
        $region14: #{tpu_custom_call.1} parent=11 // pred_check_branch
          %175 = sbr.rel (%p173) target = $region16
        $region15: #{tpu_custom_call.1} parent=11 // pred_region
          %177 = vsyncadd [#allocation5], 0
          %s178 = sshll.u32 %s1, 4
          %s179 = int_to_ptr.hbm [resolvable:$true] %s178
          %s180 = sshll.u32 [#allocation4], 4
          %s181 = int_to_ptr.vmem [resolvable:$true] %s180
          %186 = dma.hbm_to_vmem [thread:$0]  %s179, 256, %s181, [#allocation5], 64, 64, 4
        $region16: #{tpu_custom_call.1} parent=11 // pred_fallthru
          _
        // Predicated region
        $region17: #{tpu_custom_call.1} parent=11 // pred_check
          %p187 = pneg %p85
        $region18: #{tpu_custom_call.1} parent=11 // pred_check_branch
          %189 = sbr.rel (%p187) target = $region20
        $region19: #{tpu_custom_call.1} parent=11 // pred_region
          %191 = vsyncadd [#allocation5], 0
          %s192 = sshll.u32 %s2, 4
          %s193 = int_to_ptr.hbm [resolvable:$true] %s192
          %s194 = sshll.u32 [#allocation6], 4
          %s195 = int_to_ptr.vmem [resolvable:$true] %s194
          %200 = dma.hbm_to_vmem [thread:$0]  %s193, 256, %s195, [#allocation5], 64, 64, 4
        $region20: #{tpu_custom_call.1} parent=11 // pred_fallthru
          _
        // Predicated region
        $region21: #{tpu_custom_call.1} parent=11 // pred_check
          %p201 = pneg %p106
        $region22: #{tpu_custom_call.1} parent=11 // pred_check_branch
          %203 = sbr.rel (%p201) target = $region24
        $region23: #{tpu_custom_call.1} parent=11 // pred_region
          %205 = vsyncadd [#allocation8], 0
          %s206 = sshll.u32 %s3, 4
          %s207 = int_to_ptr.hbm [resolvable:$true] %s206
          %s208 = sshll.u32 [#allocation7], 4
          %s209 = int_to_ptr.vmem [resolvable:$true] %s208
          %214 = dma.hbm_to_vmem [thread:$0]  %s207, 256, %s209, [#allocation8], 64, 64, 4
        $region24: #{tpu_custom_call.1} parent=11 // pred_fallthru
          _
      $region12: #{tpu_custom_call.1} parent=5 // pred_fallthru
        _
      %p215 = scmp.lt.s32.totalorder %s17, 2
      // Predicated region
      $region25: #{tpu_custom_call.1} parent=5 // pred_check
        %p216 = pneg %p215
      $region26: #{tpu_custom_call.1} parent=5 // pred_check_branch
        %218 = sbr.rel (%p216) target = $region28
      $region27: #{tpu_custom_call.1} parent=5 // pred_region
        // Predicated region
        $region29: #{tpu_custom_call.1} parent=27 // pred_check
          %p219 = pneg %p37
        $region30: #{tpu_custom_call.1} parent=27 // pred_check_branch
          %221 = sbr.rel (%p219) target = $region32
        $region31: #{tpu_custom_call.1} parent=27 // pred_region
          %s222 = sand.u32 %s27, 1
          %s223 = scalar_lea.sflag [#allocation3], %s222
          %s224 = sand.u32 %s27, 1
          %s225 = smul.addr %s224, 16
          %s226 = scalar_lea.vmem [#allocation2], %s225
          %228 = vsyncadd %s223, 0
          %s229 = smul.addr %s17, 4
          %s230 = smul.addr %s229, 4
          %s231 = scalar_lea.hbm %s0, %s230
          %s232 = sshll.u32 %s231, 4
          %s233 = int_to_ptr.hbm [resolvable:$true] %s232
          %s234 = sshll.u32 %s226, 4
          %s235 = int_to_ptr.vmem [resolvable:$true] %s234
          %240 = dma.hbm_to_vmem [thread:$0]  %s233, 256, %s235, %s223, 64, 64, 4
        $region32: #{tpu_custom_call.1} parent=27 // pred_fallthru
          _
      $region28: #{tpu_custom_call.1} parent=5 // pred_fallthru
        _
      %p241 = scmp.le.s32.totalorder 1, %s17
      %p242 = scmp.lt.s32.totalorder %s17, 3
      %p243 = pnand %p241, %p242
      %p244 = pneg %p243
      // Predicated region
      $region33: #{tpu_custom_call.1} parent=5 // pred_check
        _
      $region34: #{tpu_custom_call.1} parent=5 // pred_check_branch
        %246 = sbr.rel (%p243) target = $region36
      $region35: #{tpu_custom_call.1} parent=5 // pred_region
        %s247 = ssub.s32 %s17, 1
        %s248 = sand.u32 %s30, 1
        %s249 = scalar_lea.sflag [#allocation3], %s248
        %s250 = sand.u32 %s30, 1
        %s251 = smul.addr %s250, 16
        %s252 = scalar_lea.vmem [#allocation2], %s251
        // Predicated region
        $region37: #{tpu_custom_call.1} parent=35 // pred_check
          %p253 = pneg %p43
        $region38: #{tpu_custom_call.1} parent=35 // pred_check_branch
          %255 = sbr.rel (%p253) target = $region40
        $region39: #{tpu_custom_call.1} parent=35 // pred_region
          %257 = dma.done %s249, 256
        $region40: #{tpu_custom_call.1} parent=35 // pred_fallthru
          _
        // Predicated region
        $region41: #{tpu_custom_call.1} parent=35 // pred_check
          %p258 = pneg %p64
        $region42: #{tpu_custom_call.1} parent=35 // pred_check_branch
          %260 = sbr.rel (%p258) target = $region44
        $region43: #{tpu_custom_call.1} parent=35 // pred_region
          %262 = dma.done [#allocation5], 256
        $region44: #{tpu_custom_call.1} parent=35 // pred_fallthru
          _
        // Predicated region
        $region45: #{tpu_custom_call.1} parent=35 // pred_check
          %p263 = pneg %p85
        $region46: #{tpu_custom_call.1} parent=35 // pred_check_branch
          %265 = sbr.rel (%p263) target = $region48
        $region47: #{tpu_custom_call.1} parent=35 // pred_region
          %267 = dma.done [#allocation5], 256
        $region48: #{tpu_custom_call.1} parent=35 // pred_fallthru
          _
        // Predicated region
        $region49: #{tpu_custom_call.1} parent=35 // pred_check
          %p268 = pneg %p106
        $region50: #{tpu_custom_call.1} parent=35 // pred_check_branch
          %270 = sbr.rel (%p268) target = $region52
        $region51: #{tpu_custom_call.1} parent=35 // pred_region
          %272 = dma.done [#allocation8], 256
        $region52: #{tpu_custom_call.1} parent=35 // pred_fallthru
          _
        %s273 = sand.u32 %s30, 1
        %s274 = scalar_lea.sflag [#allocation3], %s273
        %s275 = sand.u32 %s30, 1
        %s276 = smul.addr %s275, 16
        %s277 = scalar_lea.vmem [#allocation2], %s276
        %p278 = pneg %p43
        %p279 = pneg %p40
        %p280 = pneg %p64
        %p281 = pneg %p61
        %p282 = pneg %p85
        %p283 = pneg %p82
        %p284 = pneg %p106
        %p285 = pneg %p103
        %p286 = pneg %p132
        %p287 = pneg %p129
        %p288 = scmp.lt.s32.totalorder %s22, 1
        %s289 = scalar_select %p288, %s22, 1
        %s290 = smul.addr %s289, 4
        %s291 = smul.addr %s290, 8
        %s292 = scalar_lea.vmem %s4, %s291
        %p293 = pneg %p158
        %p294 = pneg %p155
        %p295 = scmp.lt.s32.totalorder %s22, 1
        %s296 = scalar_select %p295, %s22, 1
        %s297 = smul.addr %s296, 4
        %s298 = smul.addr %s297, 8
        %s299 = scalar_lea.vmem %s5, %s298
        %p300 = scmp.lt.s32.totalorder %s22, 1
        %s301 = scalar_select %p300, %s22, 1
        %s302 = smul.addr %s301, 4
        %s303 = smul.addr %s302, 8
        %s304 = scalar_lea.vmem %s4, %s303
        %p305 = scmp.lt.s32.totalorder %s22, 1
        %s306 = scalar_select %p305, %s22, 1
        %s307 = smul.addr %s306, 4
        %s308 = smul.addr %s307, 8
        %s309 = scalar_lea.vmem %s5, %s308
        %v312 = vld [vmem:[%s252] sm:$0xf]
        %v313 = vld [vmem:[%s252 + $0x4] sm:$0xf]
        %v314 = vld [vmem:[%s252 + $0x8] sm:$0xf]
        %v315 = vld [vmem:[%s252 + $0xc] sm:$0xf]
        %v320 = vunpack.c.l.b16 %v312
        %v321 = vunpack.c.l.b16 %v313
        %v322 = vunpack.c.l.b16 %v314
        %v323 = vunpack.c.l.b16 %v315
        %v324 = vpack.c.b16 %v321, %v320
        %v325 = vpack.c.b16 %v323, %v322
        %vm326 = vcmask 523264
        %v328 = vsel %vm326, %v324, 0
        %v331 = vsel %vm326, %v325, 0
        %333 = vmatpush.bf16.msra.mxu0 0
        %334 = vmatpush.bf16.msra.mxu0 0
        %335 = vmatpush.bf16.msra.mxu0 0
        %336 = vmatpush.bf16.msra.mxu0 0
        %337 = vmatpush.bf16.msra.mxu0 1065369472
        %338 = vmatpush.bf16.msra.mxu0 1065369472
        %339 = vmatpush.bf16.msra.mxu0 1065369472
        %340 = vmatpush.bf16.msra.mxu0 1065369472
        %341 = vmatmul.bf16.gmra.mxu0 %v328
        %v342 = vpop.f32.mrf.mxu0
        %v343 = vadd.f32 0.0, %v342
        %v344 = vpop.f32.mrf.mxu0
        %v345 = vadd.f32 0.0, %v344
        %346 = vmatmul.bf16.gmra.mxu0 %v331
        %v347 = vpop.f32.mrf.mxu0
        %v348 = vadd.f32 0.0, %v347
        %v349 = vpop.f32.mrf.mxu0
        %v350 = vadd.f32 0.0, %v349
        %351 = vdwg.mxu0
        %v352 = vmul.f32 %v343, 0.015625
        %v353 = vmul.f32 %v345, 0.015625
        %v354 = vmul.f32 %v348, 0.015625
        %v355 = vmul.f32 %v350, 0.015625
        %v356 = vld [vmem:[#allocation6] sm:$0xf]
        %v357 = vld [vmem:[#allocation6 + $0x4] sm:$0xf]
        %v358 = vld [vmem:[#allocation6 + $0x8] sm:$0xf]
        %v359 = vld [vmem:[#allocation6 + $0xc] sm:$0xf]
        %v360 = vpack.c.bf16 %v353, %v352
        %v361 = vpack.c.bf16 %v355, %v354
        %v366 = vunpack.c.l.b16 %v356
        %v367 = vunpack.c.l.b16 %v357
        %v368 = vunpack.c.l.b16 %v358
        %v369 = vunpack.c.l.b16 %v359
        %v370 = vpack.c.b16 %v367, %v366
        %v371 = vpack.c.b16 %v369, %v368
        %vm372 = vcmask 261120
        %v374 = vsel %vm372, %v370, 0
        %v377 = vsel %vm372, %v371, 0
        %379 = vmatpush.bf16.msra.mxu0 0
        %380 = vmatpush.bf16.msra.mxu0 0
        %381 = vmatpush.bf16.msra.mxu0 0
        %382 = vmatpush.bf16.msra.mxu0 0
        %383 = vmatpush.bf16.msra.mxu0 0
        %384 = vmatpush.bf16.msra.mxu0 0
        %385 = vmatpush.bf16.msra.mxu0 %v361
        %386 = vmatpush.bf16.msra.mxu0 %v360
        %387 = vmatmul.bf16.gmra.mxu0 %v374
        %v388 = vpop.f32.mrf.mxu0
        %v389 = vadd.f32 0.0, %v388
        %v390 = vpop.f32.mrf.mxu0
        %v391 = vadd.f32 0.0, %v390
        %392 = vmatmul.bf16.gmra.mxu0 %v377
        %v393 = vpop.f32.mrf.mxu0
        %v394 = vadd.f32 0.0, %v393
        %v395 = vpop.f32.mrf.mxu0
        %v396 = vadd.f32 0.0, %v395
        %397 = vdwg.mxu0
        %vm398 = vcmask 7168
        %399 = vst.msk [vmem:[%s304] sm:$0xff] %vm398, %v389
        %400 = vst.msk [vmem:[%s304 + $0x8] sm:$0xff] %vm398, %v391
        %401 = vst.msk [vmem:[%s304 + $0x10] sm:$0xff] %vm398, %v394
        %402 = vst.msk [vmem:[%s304 + $0x18] sm:$0xff] %vm398, %v396
        %v403 = vld [vmem:[#allocation4] sm:$0xf]
        %v404 = vld [vmem:[#allocation4 + $0x4] sm:$0xf]
        %v405 = vld [vmem:[#allocation4 + $0x8] sm:$0xf]
        %v406 = vld [vmem:[#allocation4 + $0xc] sm:$0xf]
        %v411 = vunpack.c.l.b16 %v403
        %v412 = vunpack.c.l.b16 %v404
        %v413 = vunpack.c.l.b16 %v405
        %v414 = vunpack.c.l.b16 %v406
        %v415 = vpack.c.b16 %v412, %v411
        %v416 = vpack.c.b16 %v414, %v413
        %v420 = vsel %vm372, %v415, 0
        %v423 = vsel %vm372, %v416, 0
        %425 = vmatpush.bf16.msra.mxu0 0
        %426 = vmatpush.bf16.msra.mxu0 0
        %427 = vmatpush.bf16.msra.mxu0 0
        %428 = vmatpush.bf16.msra.mxu0 0
        %429 = vmatpush.bf16.msra.mxu0 0
        %430 = vmatpush.bf16.msra.mxu0 0
        %431 = vmatpush.bf16.msra.mxu0 %v325
        %432 = vmatpush.bf16.msra.mxu0 %v324
        %433 = vmatmul.bf16.gmra.mxu0 %v420
        %v434 = vpop.f32.mrf.mxu0
        %v435 = vadd.f32 0.0, %v434
        %v436 = vpop.f32.mrf.mxu0
        %v437 = vadd.f32 0.0, %v436
        %438 = vmatmul.bf16.gmra.mxu0 %v423
        %v439 = vpop.f32.mrf.mxu0
        %v440 = vadd.f32 0.0, %v439
        %v441 = vpop.f32.mrf.mxu0
        %v442 = vadd.f32 0.0, %v441
        %443 = vdwg.mxu0
        %v444 = vmul.f32 %v435, %v435
        %v445 = vmul.f32 %v437, %v437
        %v446 = vmul.f32 %v440, %v440
        %v447 = vmul.f32 %v442, %v442
        %v448 = vsel %vm326, %v444, 0.0
        %v449 = vsel %vm326, %v445, 0.0
        %v450 = vadd.f32 %v448, %v449
        %v451 = vsel %vm326, %v446, 0.0
        %v452 = vadd.f32 %v450, %v451
        %v453 = vsel %vm326, %v447, 0.0
        %v454 = vadd.f32 %v452, %v453
        %v455 = vrot.slane %v454, 4
        %v456 = vadd.f32 %v454, %v455
        %v457 = vrot.slane %v456, 2
        %v458 = vadd.f32 %v456, %v457
        %v459 = vrot.slane %v458, 1
        %v460 = vadd.f32 %v458, %v459
        %v461 = vmax.f32 %v460, 1e-24
        %v462 = vrsqrt.pop %v461
        %v463 = vmul.f32 %v462, %v461
        %v464 = vmul.f32 %v463, %v462
        %v465 = vmul.f32 0.5, %v464
        %v466 = vsub.f32 1.5, %v465
        %v467 = vmul.f32 %v462, %v466
        %vm468 = vweird.f32 %v461
        %vm469 = vweird.f32 %v462
        %vm470 = vmor %vm468, %vm469
        %v471 = vsel %vm470, %v462, %v467
        %v472 = vmul.f32 %v471, 0.8264463
        %v473 = vmul.f32 %v435, %v472
        %v474 = vmul.f32 %v437, %v472
        %v475 = vmul.f32 %v440, %v472
        %v476 = vmul.f32 %v442, %v472
        %v477 = vsel %vm326, %v473, -inf
        %478 = vmax.xlane.f32.xlu0 %v477
        %v479 = vpop.xlane.xlu0 %478
        %v480 = vsel %vm326, %v474, -inf
        %481 = vmax.xlane.f32.xlu0 %v480
        %v482 = vpop.xlane.xlu0 %481
        %v483 = vsel %vm326, %v475, -inf
        %484 = vmax.xlane.f32.xlu0 %v483
        %v485 = vpop.xlane.xlu0 %484
        %v486 = vsel %vm326, %v476, -inf
        %487 = vmax.xlane.f32.xlu0 %v486
        %v488 = vpop.xlane.xlu0 %487
        %v489 = vsub.f32 %v473, %v479
        %v490 = vsub.f32 %v474, %v482
        %v491 = vsub.f32 %v475, %v485
        %v492 = vsub.f32 %v476, %v488
        %v493 = vmul.f32 %v489, 1.442695
        %v494 = vpow.pop %v493
        %v495 = vmul.f32 %v490, 1.442695
        %v496 = vpow.pop %v495
        %v497 = vmul.f32 %v491, 1.442695
        %v498 = vpow.pop %v497
        %v499 = vmul.f32 %v492, 1.442695
        %v500 = vpow.pop %v499
        %v501 = vsel %vm326, %v494, 0.0
        %502 = vadd.xlane.f32.xlu0 %v501
        %v503 = vpop.xlane.xlu0 %502
        %v504 = vsel %vm326, %v496, 0.0
        %505 = vadd.xlane.f32.xlu0 %v504
        %v506 = vpop.xlane.xlu0 %505
        %v507 = vsel %vm326, %v498, 0.0
        %508 = vadd.xlane.f32.xlu0 %v507
        %v509 = vpop.xlane.xlu0 %508
        %v510 = vsel %vm326, %v500, 0.0
        %511 = vadd.xlane.f32.xlu0 %v510
        %v512 = vpop.xlane.xlu0 %511
        %v513 = vrcp.pop %v503
        %v514 = vrcp.pop %v506
        %v515 = vrcp.pop %v509
        %v516 = vrcp.pop %v512
        %v517 = vmul.f32 %v494, %v513
        %v518 = vmul.f32 %v496, %v514
        %v519 = vmul.f32 %v498, %v515
        %v520 = vmul.f32 %v500, %v516
        %v521 = vpack.c.bf16 %v517, %v517
        %v522 = vpack.c.bf16 %v518, %v518
        %v523 = vpack.c.bf16 %v519, %v519
        %v524 = vpack.c.bf16 %v520, %v520
        %v525 = vrot.slane %v312, 2
        %v526 = vrot.slane %v313, 2
        %v527 = vrot.slane %v314, 2
        %v528 = vrot.slane %v315, 2
        %vm529 = vcmask 1041408
        %v532 = vsel %vm529, %v312, %v525
        %vm533 = vcmask 1043458
        %v534 = vsel %vm533, %v312, %v525
        %v536 = vrot.slane %v534, 2
        %v539 = vsel %vm529, %v313, %v526
        %v540 = vsel %vm533, %v313, %v526
        %v542 = vrot.slane %v540, 2
        %v545 = vsel %vm529, %v314, %v527
        %v546 = vsel %vm533, %v314, %v527
        %v548 = vrot.slane %v546, 2
        %v551 = vsel %vm529, %v315, %v528
        %v552 = vsel %vm533, %v315, %v528
        %v554 = vrot.slane %v552, 2
        %v559 = vrot.slane %v521, 2
        %v560 = vrot.slane %v522, 2
        %v561 = vrot.slane %v523, 2
        %v562 = vrot.slane %v524, 2
        %v565 = vsel %vm529, %v521, %v559
        %v566 = vsel %vm533, %v521, %v559
        %v568 = vrot.slane %v566, 2
        %v571 = vsel %vm529, %v522, %v560
        %v572 = vsel %vm533, %v522, %v560
        %v574 = vrot.slane %v572, 2
        %v577 = vsel %vm529, %v523, %v561
        %v578 = vsel %vm533, %v523, %v561
        %v580 = vrot.slane %v578, 2
        %v583 = vsel %vm529, %v524, %v562
        %v584 = vsel %vm533, %v524, %v562
        %v586 = vrot.slane %v584, 2
        %v587 = vsel %vm326, %v532, 0
        %v589 = vsel %vm326, %v565, 0
        %591 = vmatpush.bf16.xpose.msra.mxu0 0
        %592 = vmatpush.bf16.xpose.msra.mxu0 0
        %593 = vmatpush.bf16.xpose.msra.mxu0 0
        %594 = vmatpush.bf16.xpose.msra.mxu0 0
        %595 = vmatpush.bf16.xpose.msra.mxu0 0
        %596 = vmatpush.bf16.xpose.msra.mxu0 0
        %597 = vmatpush.bf16.xpose.msra.mxu0 0
        %598 = vmatpush.bf16.xpose.msra.mxu0 %v589
        %599 = vmatmul.bf16.gmra.mxu0 %v587
        %v600 = vpop.f32.mrf.mxu0
        %v601 = vadd.f32 0.0, %v600
        %v602 = vpop.f32.mrf.mxu0
        %603 = vdwg.mxu0
        %v605 = vsel %vm326, %v536, 0
        %v608 = vsel %vm326, %v568, 0
        %610 = vmatpush.bf16.xpose.msra.mxu0 0
        %611 = vmatpush.bf16.xpose.msra.mxu0 0
        %612 = vmatpush.bf16.xpose.msra.mxu0 0
        %613 = vmatpush.bf16.xpose.msra.mxu0 0
        %614 = vmatpush.bf16.xpose.msra.mxu0 0
        %615 = vmatpush.bf16.xpose.msra.mxu0 0
        %616 = vmatpush.bf16.xpose.msra.mxu0 0
        %617 = vmatpush.bf16.xpose.msra.mxu0 %v608
        %618 = vmatmul.bf16.gmra.mxu0 %v605
        %v619 = vpop.f32.mrf.mxu0
        %v620 = vadd.f32 0.0, %v619
        %v621 = vpop.f32.mrf.mxu0
        %622 = vdwg.mxu0
        %v623 = vsel %vm326, %v539, 0
        %v625 = vsel %vm326, %v571, 0
        %627 = vmatpush.bf16.xpose.msra.mxu0 0
        %628 = vmatpush.bf16.xpose.msra.mxu0 0
        %629 = vmatpush.bf16.xpose.msra.mxu0 0
        %630 = vmatpush.bf16.xpose.msra.mxu0 0
        %631 = vmatpush.bf16.xpose.msra.mxu0 0
        %632 = vmatpush.bf16.xpose.msra.mxu0 0
        %633 = vmatpush.bf16.xpose.msra.mxu0 0
        %634 = vmatpush.bf16.xpose.msra.mxu0 %v625
        %635 = vmatmul.bf16.gmra.mxu0 %v623
        %v636 = vpop.f32.mrf.mxu0
        %v637 = vadd.f32 0.0, %v636
        %v638 = vpop.f32.mrf.mxu0
        %639 = vdwg.mxu0
        %v641 = vsel %vm326, %v542, 0
        %v644 = vsel %vm326, %v574, 0
        %646 = vmatpush.bf16.xpose.msra.mxu0 0
        %647 = vmatpush.bf16.xpose.msra.mxu0 0
        %648 = vmatpush.bf16.xpose.msra.mxu0 0
        %649 = vmatpush.bf16.xpose.msra.mxu0 0
        %650 = vmatpush.bf16.xpose.msra.mxu0 0
        %651 = vmatpush.bf16.xpose.msra.mxu0 0
        %652 = vmatpush.bf16.xpose.msra.mxu0 0
        %653 = vmatpush.bf16.xpose.msra.mxu0 %v644
        %654 = vmatmul.bf16.gmra.mxu0 %v641
        %v655 = vpop.f32.mrf.mxu0
        %v656 = vadd.f32 0.0, %v655
        %v657 = vpop.f32.mrf.mxu0
        %658 = vdwg.mxu0
        %v659 = vsel %vm326, %v545, 0
        %v661 = vsel %vm326, %v577, 0
        %663 = vmatpush.bf16.xpose.msra.mxu0 0
        %664 = vmatpush.bf16.xpose.msra.mxu0 0
        %665 = vmatpush.bf16.xpose.msra.mxu0 0
        %666 = vmatpush.bf16.xpose.msra.mxu0 0
        %667 = vmatpush.bf16.xpose.msra.mxu0 0
        %668 = vmatpush.bf16.xpose.msra.mxu0 0
        %669 = vmatpush.bf16.xpose.msra.mxu0 0
        %670 = vmatpush.bf16.xpose.msra.mxu0 %v661
        %671 = vmatmul.bf16.gmra.mxu0 %v659
        %v672 = vpop.f32.mrf.mxu0
        %v673 = vadd.f32 0.0, %v672
        %v674 = vpop.f32.mrf.mxu0
        %675 = vdwg.mxu0
        %v677 = vsel %vm326, %v548, 0
        %v680 = vsel %vm326, %v580, 0
        %682 = vmatpush.bf16.xpose.msra.mxu0 0
        %683 = vmatpush.bf16.xpose.msra.mxu0 0
        %684 = vmatpush.bf16.xpose.msra.mxu0 0
        %685 = vmatpush.bf16.xpose.msra.mxu0 0
        %686 = vmatpush.bf16.xpose.msra.mxu0 0
        %687 = vmatpush.bf16.xpose.msra.mxu0 0
        %688 = vmatpush.bf16.xpose.msra.mxu0 0
        %689 = vmatpush.bf16.xpose.msra.mxu0 %v680
        %690 = vmatmul.bf16.gmra.mxu0 %v677
        %v691 = vpop.f32.mrf.mxu0
        %v692 = vadd.f32 0.0, %v691
        %v693 = vpop.f32.mrf.mxu0
        %694 = vdwg.mxu0
        %v695 = vsel %vm326, %v551, 0
        %v697 = vsel %vm326, %v583, 0
        %699 = vmatpush.bf16.xpose.msra.mxu0 0
        %700 = vmatpush.bf16.xpose.msra.mxu0 0
        %701 = vmatpush.bf16.xpose.msra.mxu0 0
        %702 = vmatpush.bf16.xpose.msra.mxu0 0
        %703 = vmatpush.bf16.xpose.msra.mxu0 0
        %704 = vmatpush.bf16.xpose.msra.mxu0 0
        %705 = vmatpush.bf16.xpose.msra.mxu0 0
        %706 = vmatpush.bf16.xpose.msra.mxu0 %v697
        %707 = vmatmul.bf16.gmra.mxu0 %v695
        %v708 = vpop.f32.mrf.mxu0
        %v709 = vadd.f32 0.0, %v708
        %v710 = vpop.f32.mrf.mxu0
        %711 = vdwg.mxu0
        %v713 = vsel %vm326, %v554, 0
        %v716 = vsel %vm326, %v586, 0
        %718 = vmatpush.bf16.xpose.msra.mxu0 0
        %719 = vmatpush.bf16.xpose.msra.mxu0 0
        %720 = vmatpush.bf16.xpose.msra.mxu0 0
        %721 = vmatpush.bf16.xpose.msra.mxu0 0
        %722 = vmatpush.bf16.xpose.msra.mxu0 0
        %723 = vmatpush.bf16.xpose.msra.mxu0 0
        %724 = vmatpush.bf16.xpose.msra.mxu0 0
        %725 = vmatpush.bf16.xpose.msra.mxu0 %v716
        %726 = vmatmul.bf16.gmra.mxu0 %v713
        %v727 = vpop.f32.mrf.mxu0
        %v728 = vadd.f32 0.0, %v727
        %v729 = vpop.f32.mrf.mxu0
        %730 = vdwg.mxu0
        %v731 = vld [vmem:[#allocation7] sm:$0xf]
        %v732 = vld [vmem:[#allocation7 + $0x4] sm:$0xf]
        %v733 = vld [vmem:[#allocation7 + $0x8] sm:$0xf]
        %v734 = vld [vmem:[#allocation7 + $0xc] sm:$0xf]
        %743 = vst [vmem:[#allocation1] ss:$2 sm:$0xff] %v601
        %s744 = scalar_lea.vmem [#allocation1], 1
        %745 = vst [vmem:[%s744] ss:$2 sm:$0xff] %v620
        %s746 = scalar_lea.vmem [#allocation1], 16
        %747 = vst [vmem:[%s746] ss:$2 sm:$0xff] %v637
        %s748 = scalar_lea.vmem [#allocation1], 17
        %749 = vst [vmem:[%s748] ss:$2 sm:$0xff] %v656
        %s750 = scalar_lea.vmem [#allocation1], 32
        %751 = vst [vmem:[%s750] ss:$2 sm:$0xff] %v673
        %s752 = scalar_lea.vmem [#allocation1], 33
        %753 = vst [vmem:[%s752] ss:$2 sm:$0xff] %v692
        %s754 = scalar_lea.vmem [#allocation1], 48
        %755 = vst [vmem:[%s754] ss:$2 sm:$0xff] %v709
        %s756 = scalar_lea.vmem [#allocation1], 49
        %757 = vst [vmem:[%s756] ss:$2 sm:$0xff] %v728
        %v758 = vld.sshfl [vmem:[#allocation1] sm:$0xff pattern:$0x75316420]
        %v759 = vld.sshfl [vmem:[#allocation1 + $0x10] sm:$0xff pattern:$0x75316420]
        %v760 = vld.sshfl [vmem:[#allocation1 + $0x20] sm:$0xff pattern:$0x75316420]
        %v761 = vld.sshfl [vmem:[#allocation1 + $0x30] sm:$0xff pattern:$0x75316420]
        %v766 = vpack.c.bf16 %v759, %v758
        %v767 = vpack.c.bf16 %v761, %v760
        %v772 = vunpack.c.l.b16 %v731
        %v773 = vunpack.c.l.b16 %v732
        %v774 = vunpack.c.l.b16 %v733
        %v775 = vunpack.c.l.b16 %v734
        %v776 = vpack.c.b16 %v773, %v772
        %v777 = vpack.c.b16 %v775, %v774
        %v779 = vsel %vm372, %v776, 0
        %v782 = vsel %vm372, %v777, 0
        %784 = vmatpush.bf16.msra.mxu0 0
        %785 = vmatpush.bf16.msra.mxu0 0
        %786 = vmatpush.bf16.msra.mxu0 0
        %787 = vmatpush.bf16.msra.mxu0 0
        %788 = vmatpush.bf16.msra.mxu0 0
        %789 = vmatpush.bf16.msra.mxu0 0
        %790 = vmatpush.bf16.msra.mxu0 %v767
        %791 = vmatpush.bf16.msra.mxu0 %v766
        %792 = vmatmul.bf16.gmra.mxu0 %v779
        %v793 = vpop.f32.mrf.mxu0
        %v794 = vadd.f32 0.0, %v793
        %v795 = vpop.f32.mrf.mxu0
        %v796 = vadd.f32 0.0, %v795
        %797 = vmatmul.bf16.gmra.mxu0 %v782
        %v798 = vpop.f32.mrf.mxu0
        %v799 = vadd.f32 0.0, %v798
        %v800 = vpop.f32.mrf.mxu0
        %v801 = vadd.f32 0.0, %v800
        %802 = vdwg.mxu0
        %vm803 = vcmask 31744
        %804 = vst.msk [vmem:[%s309] sm:$0xff] %vm803, %v794
        %805 = vst.msk [vmem:[%s309 + $0x8] sm:$0xff] %vm803, %v796
        %806 = vst.msk [vmem:[%s309 + $0x10] sm:$0xff] %vm803, %v799
        %807 = vst.msk [vmem:[%s309 + $0x18] sm:$0xff] %vm803, %v801
        %p808 = scmp.lt.s32.totalorder %s22, 1
        %s809 = scalar_select %p808, %s22, 1
        %s810 = smul.addr %s809, 4
        %s811 = smul.addr %s810, 8
        %s812 = scalar_lea.vmem %s4, %s811
        %p813 = scmp.lt.s32.totalorder %s22, 1
        %s814 = scalar_select %p813, %s22, 1
        %s815 = smul.addr %s814, 4
        %s816 = smul.addr %s815, 8
        %s817 = scalar_lea.vmem %s5, %s816
        // Predicated region
        $region53: #{tpu_custom_call.1} parent=35 // pred_check
          %p818 = pneg %p129
        $region54: #{tpu_custom_call.1} parent=35 // pred_check_branch
          %820 = sbr.rel (%p818) target = $region56
        $region55: #{tpu_custom_call.1} parent=35 // pred_region
          _
        $region56: #{tpu_custom_call.1} parent=35 // pred_fallthru
          _
        // Predicated region
        $region57: #{tpu_custom_call.1} parent=35 // pred_check
          %p821 = pneg %p155
        $region58: #{tpu_custom_call.1} parent=35 // pred_check_branch
          %823 = sbr.rel (%p821) target = $region60
        $region59: #{tpu_custom_call.1} parent=35 // pred_region
          _
        $region60: #{tpu_custom_call.1} parent=35 // pred_fallthru
          _
      $region36: #{tpu_custom_call.1} parent=5 // pred_fallthru
        _
      %p824 = scmp.le.s32.totalorder 2, %s17
      // Predicated region
      $region61: #{tpu_custom_call.1} parent=5 // pred_check
        %p825 = pneg %p824
      $region62: #{tpu_custom_call.1} parent=5 // pred_check_branch
        %827 = sbr.rel (%p825) target = $region64
      $region63: #{tpu_custom_call.1} parent=5 // pred_region
        %s828 = ssub.s32 %s17, 2
        // Predicated region
        $region65: #{tpu_custom_call.1} parent=63 // pred_check
          %p829 = pneg %p135
        $region66: #{tpu_custom_call.1} parent=63 // pred_check_branch
          %831 = sbr.rel (%p829) target = $region68
        $region67: #{tpu_custom_call.1} parent=63 // pred_region
          %p832 = scmp.lt.s32.totalorder %s23, 1
          %s833 = scalar_select %p832, %s23, 1
          %s834 = smul.addr %s833, 4
          %s835 = smul.addr %s834, 8
          %s836 = scalar_lea.vmem %s4, %s835
        $region68: #{tpu_custom_call.1} parent=63 // pred_fallthru
          _
        // Predicated region
        $region69: #{tpu_custom_call.1} parent=63 // pred_check
          %p837 = pneg %p161
        $region70: #{tpu_custom_call.1} parent=63 // pred_check_branch
          %839 = sbr.rel (%p837) target = $region72
        $region71: #{tpu_custom_call.1} parent=63 // pred_region
          %p840 = scmp.lt.s32.totalorder %s23, 1
          %s841 = scalar_select %p840, %s23, 1
          %s842 = smul.addr %s841, 4
          %s843 = smul.addr %s842, 8
          %s844 = scalar_lea.vmem %s5, %s843
        $region72: #{tpu_custom_call.1} parent=63 // pred_fallthru
          _
      $region64: #{tpu_custom_call.1} parent=5 // pred_fallthru
        _
    $region6: #{tpu_custom_call.1} parent=1 // loop_footer
      %s21 = sadd.s32 1, %s17
    $region7: #{tpu_custom_call.1} parent=1 // loop_footer_branch
      %16 = sbr.rel target = $region3
    $region8: #{tpu_custom_call.1} parent=1 // loop_exit
      _
    %845 = vsyncpa [#allocation3], 1
    %s846 = scalar_lea.sflag [#allocation3], 1
    %847 = vsyncpa %s846, 1
    %848 = vsyncpa [#allocation5], 1
    %849 = vsyncpa [#allocation8], 1

// kernel: tpu_custom_call.1
$region0: #{tpu_custom_call.1}
  #allocation0 [shape = 'u32[]', space=smem, size = 0x4, offset = 0x4, fixed_abs, tag = 'smem constant byte address 0x4 - core index']
  #allocation1 [shape = 'u32[72,128]{1,0:T(1,128)}', space=vmem, size = 0x9000, scoped, tag = 'internal scratch']
  %s0 = inlined_call_operand.hbm [shape: bf16[2,32,64], index: 0, kind: input, shape index: {}]
  %s1 = inlined_call_operand.hbm [shape: bf16[32,32], index: 1, kind: input, shape index: {}]
  %s2 = inlined_call_operand.hbm [shape: bf16[32,32], index: 2, kind: input, shape index: {}]
  %s3 = inlined_call_operand.hbm [shape: bf16[32,32], index: 3, kind: input, shape index: {}]
  %s4 = inlined_call_operand.vmem [shape: f32[2,32,1], index: 4, kind: output, shape index: {0}]
  %s5 = inlined_call_operand.vmem [shape: f32[2,32,4], index: 5, kind: output, shape index: {1}]
  %6 = xla_tuple %s4, %s5
  %s7 = sld [smem:[#allocation0]]
  $region73: #{tpu_custom_call.1} parent=0
    _
  %s9 = ssub.s32 1, %s7
  %s10 = scalar_select 0, %s9, %s7
  $region1: #{tpu_custom_call.1} parent=0
    #allocation2 [shape = 'u8[16384]{0}', space=vmem, size = 0x4000, scoped, tag = 'input window, operand 0']
    #allocation3 [shape = 's32[2]{0}', space=sflag, size = 0x8, scoped, tag = 'scoped memory for tpu_custom_call.1']
    #allocation4 [shape = 'u8[8192]{0}', space=vmem, size = 0x2000, scoped, tag = 'input window, operand 1, single buffered']
    #allocation5 [shape = 's32[1]{0}', space=sflag, size = 0x4, scoped, tag = 'scoped memory for tpu_custom_call.1']
    #allocation6 [shape = 'u8[8192]{0}', space=vmem, size = 0x2000, scoped, tag = 'input window, operand 2, single buffered']
    #allocation7 [shape = 'u8[8192]{0}', space=vmem, size = 0x2000, scoped, tag = 'input window, operand 3, single buffered']
    #allocation8 [shape = 's32[1]{0}', space=sflag, size = 0x4, scoped, tag = 'scoped memory for tpu_custom_call.1']
    %11 = vsyncpa [#allocation3], 0
    %s12 = scalar_lea.sflag [#allocation3], 1
    %13 = vsyncpa %s12, 0
    %14 = vsyncpa [#allocation5], 0
    %15 = vsyncpa [#allocation8], 0
    loop: start=0, step=1, limit=4
    $region2: #{tpu_custom_call.1} parent=1 // loop_pre_header
      _
    $region3: #{tpu_custom_call.1} parent=1 // loop_header
      %s17 = sphi 0, %s21
      %p18 = scmp.ge.s32.totalorder %s17, 4
      %s27 = sphi 0, %s29
      %s30 = sphi 0, %s27
      %s31 = sphi 0, %s30
      %s47 = sphi 0, %s31
      %s51 = sphi 0, %s51
      %s53 = sphi 0, %s51
      %s54 = sphi 0, %s53
      %s68 = sphi 0, %s54
      %s72 = sphi 0, %s72
      %s74 = sphi 0, %s72
      %s75 = sphi 0, %s74
      %s89 = sphi 0, %s75
      %s93 = sphi 0, %s93
      %s95 = sphi 0, %s93
      %s96 = sphi 0, %s95
      %s110 = sphi 0, %s96
      %s116 = sphi 0, %s118
      %s119 = sphi 0, %s116
      %s120 = sphi 0, %s119
      %s136 = sphi 0, %s120
      %s142 = sphi 0, %s144
      %s145 = sphi 0, %s142
      %s146 = sphi 0, %s145
      %s162 = sphi 0, %s146
    $region4: #{tpu_custom_call.1} parent=1 // loop_header_branch
      %20 = sbr.rel (%p18) target = $region8
    $region5: #{tpu_custom_call.1} parent=1 // loop_body
      %s22 = ssub.s32 %s17, 1
      %s23 = ssub.s32 %s17, 2
      %s24 = sadd.s32 %s17, 1
      %s25 = ssub.s32 %s17, %s24
      %p26 = scmp.eq.s32.totalorder %s25, 0
      %s28 = sadd.s32 %s27, 1
      %s29 = scalar_select %p26, %s27, %s28
      %p32 = pneg %p26
      %p33 = scmp.eq.s32.totalorder %s17, 1
      %p34 = por %p32, %p33
      %p35 = scmp.ne.s32.totalorder %s27, %s30
      %p36 = scmp.eq.s32.totalorder %s17, 0
      %p37 = por %p35, %p36
      %p38 = scmp.ne.s32.totalorder %s27, %s30
      %p39 = scmp.eq.s32.totalorder %s22, 1
      %p40 = por %p38, %p39
      %p41 = scmp.ne.s32.totalorder %s30, %s31
      %p42 = scmp.eq.s32.totalorder %s22, 0
      %p43 = por %p41, %p42
      %p44 = scmp.ne.s32.totalorder %s30, %s31
      %p45 = scmp.eq.s32.totalorder %s23, 1
      %p46 = por %p44, %p45
      %p48 = scmp.ne.s32.totalorder %s31, %s47
      %p49 = scmp.eq.s32.totalorder %s23, 0
      %p50 = por %p48, %p49
      %s52 = sadd.s32 %s51, 1
      %p55 = scmp.eq.s32.totalorder %s17, 1
      %p56 = scmp.ne.s32.totalorder %s51, %s53
      %p57 = scmp.eq.s32.totalorder %s17, 0
      %p58 = por %p56, %p57
      %p59 = scmp.ne.s32.totalorder %s51, %s53
      %p60 = scmp.eq.s32.totalorder %s22, 1
      %p61 = por %p59, %p60
      %p62 = scmp.ne.s32.totalorder %s53, %s54
      %p63 = scmp.eq.s32.totalorder %s22, 0
      %p64 = por %p62, %p63
      %p65 = scmp.ne.s32.totalorder %s53, %s54
      %p66 = scmp.eq.s32.totalorder %s23, 1
      %p67 = por %p65, %p66
      %p69 = scmp.ne.s32.totalorder %s54, %s68
      %p70 = scmp.eq.s32.totalorder %s23, 0
      %p71 = por %p69, %p70
      %s73 = sadd.s32 %s72, 1
      %p76 = scmp.eq.s32.totalorder %s17, 1
      %p77 = scmp.ne.s32.totalorder %s72, %s74
      %p78 = scmp.eq.s32.totalorder %s17, 0
      %p79 = por %p77, %p78
      %p80 = scmp.ne.s32.totalorder %s72, %s74
      %p81 = scmp.eq.s32.totalorder %s22, 1
      %p82 = por %p80, %p81
      %p83 = scmp.ne.s32.totalorder %s74, %s75
      %p84 = scmp.eq.s32.totalorder %s22, 0
      %p85 = por %p83, %p84
      %p86 = scmp.ne.s32.totalorder %s74, %s75
      %p87 = scmp.eq.s32.totalorder %s23, 1
      %p88 = por %p86, %p87
      %p90 = scmp.ne.s32.totalorder %s75, %s89
      %p91 = scmp.eq.s32.totalorder %s23, 0
      %p92 = por %p90, %p91
      %s94 = sadd.s32 %s93, 1
      %p97 = scmp.eq.s32.totalorder %s17, 1
      %p98 = scmp.ne.s32.totalorder %s93, %s95
      %p99 = scmp.eq.s32.totalorder %s17, 0
      %p100 = por %p98, %p99
      %p101 = scmp.ne.s32.totalorder %s93, %s95
      %p102 = scmp.eq.s32.totalorder %s22, 1
      %p103 = por %p101, %p102
      %p104 = scmp.ne.s32.totalorder %s95, %s96
      %p105 = scmp.eq.s32.totalorder %s22, 0
      %p106 = por %p104, %p105
      %p107 = scmp.ne.s32.totalorder %s95, %s96
      %p108 = scmp.eq.s32.totalorder %s23, 1
      %p109 = por %p107, %p108
      %p111 = scmp.ne.s32.totalorder %s96, %s110
      %p112 = scmp.eq.s32.totalorder %s23, 0
      %p113 = por %p111, %p112
      %s114 = ssub.s32 %s17, %s24
      %p115 = scmp.eq.s32.totalorder %s114, 0
      %s117 = sadd.s32 %s116, 1
      %s118 = scalar_select %p115, %s116, %s117
      %p121 = pneg %p115
      %p122 = scmp.eq.s32.totalorder %s17, 1
      %p123 = por %p121, %p122
      %p124 = scmp.ne.s32.totalorder %s116, %s119
      %p125 = scmp.eq.s32.totalorder %s17, 0
      %p126 = por %p124, %p125
      %p127 = scmp.ne.s32.totalorder %s116, %s119
      %p128 = scmp.eq.s32.totalorder %s22, 1
      %p129 = por %p127, %p128
      %p130 = scmp.ne.s32.totalorder %s119, %s120
      %p131 = scmp.eq.s32.totalorder %s22, 0
      %p132 = por %p130, %p131
      %p133 = scmp.ne.s32.totalorder %s119, %s120
      %p134 = scmp.eq.s32.totalorder %s23, 1
      %p135 = por %p133, %p134
      %p137 = scmp.ne.s32.totalorder %s120, %s136
      %p138 = scmp.eq.s32.totalorder %s23, 0
      %p139 = por %p137, %p138
      %s140 = ssub.s32 %s17, %s24
      %p141 = scmp.eq.s32.totalorder %s140, 0
      %s143 = sadd.s32 %s142, 1
      %s144 = scalar_select %p141, %s142, %s143
      %p147 = pneg %p141
      %p148 = scmp.eq.s32.totalorder %s17, 1
      %p149 = por %p147, %p148
      %p150 = scmp.ne.s32.totalorder %s142, %s145
      %p151 = scmp.eq.s32.totalorder %s17, 0
      %p152 = por %p150, %p151
      %p153 = scmp.ne.s32.totalorder %s142, %s145
      %p154 = scmp.eq.s32.totalorder %s22, 1
      %p155 = por %p153, %p154
      %p156 = scmp.ne.s32.totalorder %s145, %s146
      %p157 = scmp.eq.s32.totalorder %s22, 0
      %p158 = por %p156, %p157
      %p159 = scmp.ne.s32.totalorder %s145, %s146
      %p160 = scmp.eq.s32.totalorder %s23, 1
      %p161 = por %p159, %p160
      %p163 = scmp.ne.s32.totalorder %s146, %s162
      %p164 = scmp.eq.s32.totalorder %s23, 0
      %p165 = por %p163, %p164
      %p166 = scmp.le.s32.totalorder 1, %s17
      %p167 = scmp.lt.s32.totalorder %s17, 3
      %p168 = pnand %p166, %p167
      %p169 = pneg %p168
      // Predicated region
      $region9: #{tpu_custom_call.1} parent=5 // pred_check
        _
      $region10: #{tpu_custom_call.1} parent=5 // pred_check_branch
        %171 = sbr.rel (%p168) target = $region12
      $region11: #{tpu_custom_call.1} parent=5 // pred_region
        %s172 = ssub.s32 %s17, 1
        // Predicated region
        $region13: #{tpu_custom_call.1} parent=11 // pred_check
          %p173 = pneg %p64
        $region14: #{tpu_custom_call.1} parent=11 // pred_check_branch
          %175 = sbr.rel (%p173) target = $region16
        $region15: #{tpu_custom_call.1} parent=11 // pred_region
          %177 = vsyncadd [#allocation5], 0
          %s178 = sshll.u32 %s1, 4
          %s179 = int_to_ptr.hbm [resolvable:$true] %s178
          %s180 = sshll.u32 [#allocation4], 4
          %s181 = int_to_ptr.vmem [resolvable:$true] %s180
          %186 = dma.hbm_to_vmem [thread:$0]  %s179, 256, %s181, [#allocation5], 64, 64, 4
        $region16: #{tpu_custom_call.1} parent=11 // pred_fallthru
          _
        // Predicated region
        $region17: #{tpu_custom_call.1} parent=11 // pred_check
          %p187 = pneg %p85
        $region18: #{tpu_custom_call.1} parent=11 // pred_check_branch
          %189 = sbr.rel (%p187) target = $region20
        $region19: #{tpu_custom_call.1} parent=11 // pred_region
          %191 = vsyncadd [#allocation5], 0
          %s192 = sshll.u32 %s2, 4
          %s193 = int_to_ptr.hbm [resolvable:$true] %s192
          %s194 = sshll.u32 [#allocation6], 4
          %s195 = int_to_ptr.vmem [resolvable:$true] %s194
          %200 = dma.hbm_to_vmem [thread:$0]  %s193, 256, %s195, [#allocation5], 64, 64, 4
        $region20: #{tpu_custom_call.1} parent=11 // pred_fallthru
          _
        // Predicated region
        $region21: #{tpu_custom_call.1} parent=11 // pred_check
          %p201 = pneg %p106
        $region22: #{tpu_custom_call.1} parent=11 // pred_check_branch
          %203 = sbr.rel (%p201) target = $region24
        $region23: #{tpu_custom_call.1} parent=11 // pred_region
          %205 = vsyncadd [#allocation8], 0
          %s206 = sshll.u32 %s3, 4
          %s207 = int_to_ptr.hbm [resolvable:$true] %s206
          %s208 = sshll.u32 [#allocation7], 4
          %s209 = int_to_ptr.vmem [resolvable:$true] %s208
          %214 = dma.hbm_to_vmem [thread:$0]  %s207, 256, %s209, [#allocation8], 64, 64, 4
        $region24: #{tpu_custom_call.1} parent=11 // pred_fallthru
          _
      $region12: #{tpu_custom_call.1} parent=5 // pred_fallthru
        _
      %p215 = scmp.lt.s32.totalorder %s17, 2
      // Predicated region
      $region25: #{tpu_custom_call.1} parent=5 // pred_check
        %p216 = pneg %p215
      $region26: #{tpu_custom_call.1} parent=5 // pred_check_branch
        %218 = sbr.rel (%p216) target = $region28
      $region27: #{tpu_custom_call.1} parent=5 // pred_region
        // Predicated region
        $region29: #{tpu_custom_call.1} parent=27 // pred_check
          %p219 = pneg %p37
        $region30: #{tpu_custom_call.1} parent=27 // pred_check_branch
          %221 = sbr.rel (%p219) target = $region32
        $region31: #{tpu_custom_call.1} parent=27 // pred_region
          %s222 = sand.u32 %s27, 1
          %s223 = scalar_lea.sflag [#allocation3], %s222
          %s224 = sand.u32 %s27, 1
          %s225 = smul.addr %s224, 16
          %s226 = scalar_lea.vmem [#allocation2], %s225
          %228 = vsyncadd %s223, 0
          %s229 = smul.addr %s17, 4
          %s230 = smul.addr %s229, 4
          %s231 = scalar_lea.hbm %s0, %s230
          %s232 = sshll.u32 %s231, 4
          %s233 = int_to_ptr.hbm [resolvable:$true] %s232
          %s234 = sshll.u32 %s226, 4
          %s235 = int_to_ptr.vmem [resolvable:$true] %s234
          %240 = dma.hbm_to_vmem [thread:$0]  %s233, 256, %s235, %s223, 64, 64, 4
        $region32: #{tpu_custom_call.1} parent=27 // pred_fallthru
          _
      $region28: #{tpu_custom_call.1} parent=5 // pred_fallthru
        _
      %p241 = scmp.le.s32.totalorder 1, %s17
      %p242 = scmp.lt.s32.totalorder %s17, 3
      %p243 = pnand %p241, %p242
      %p244 = pneg %p243
      // Predicated region
      $region33: #{tpu_custom_call.1} parent=5 // pred_check
        _
      $region34: #{tpu_custom_call.1} parent=5 // pred_check_branch
        %246 = sbr.rel (%p243) target = $region36
      $region35: #{tpu_custom_call.1} parent=5 // pred_region
        %s247 = ssub.s32 %s17, 1
        %s248 = sand.u32 %s30, 1
        %s249 = scalar_lea.sflag [#allocation3], %s248
        %s250 = sand.u32 %s30, 1
        %s251 = smul.addr %s250, 16
        %s252 = scalar_lea.vmem [#allocation2], %s251
        // Predicated region
        $region37: #{tpu_custom_call.1} parent=35 // pred_check
          %p253 = pneg %p43
        $region38: #{tpu_custom_call.1} parent=35 // pred_check_branch
          %255 = sbr.rel (%p253) target = $region40
        $region39: #{tpu_custom_call.1} parent=35 // pred_region
          %257 = dma.done %s249, 256
        $region40: #{tpu_custom_call.1} parent=35 // pred_fallthru
          _
        // Predicated region
        $region41: #{tpu_custom_call.1} parent=35 // pred_check
          %p258 = pneg %p64
        $region42: #{tpu_custom_call.1} parent=35 // pred_check_branch
          %260 = sbr.rel (%p258) target = $region44
        $region43: #{tpu_custom_call.1} parent=35 // pred_region
          %262 = dma.done [#allocation5], 256
        $region44: #{tpu_custom_call.1} parent=35 // pred_fallthru
          _
        // Predicated region
        $region45: #{tpu_custom_call.1} parent=35 // pred_check
          %p263 = pneg %p85
        $region46: #{tpu_custom_call.1} parent=35 // pred_check_branch
          %265 = sbr.rel (%p263) target = $region48
        $region47: #{tpu_custom_call.1} parent=35 // pred_region
          %267 = dma.done [#allocation5], 256
        $region48: #{tpu_custom_call.1} parent=35 // pred_fallthru
          _
        // Predicated region
        $region49: #{tpu_custom_call.1} parent=35 // pred_check
          %p268 = pneg %p106
        $region50: #{tpu_custom_call.1} parent=35 // pred_check_branch
          %270 = sbr.rel (%p268) target = $region52
        $region51: #{tpu_custom_call.1} parent=35 // pred_region
          %272 = dma.done [#allocation8], 256
        $region52: #{tpu_custom_call.1} parent=35 // pred_fallthru
          _
        %s273 = sand.u32 %s30, 1
        %s274 = scalar_lea.sflag [#allocation3], %s273
        %s275 = sand.u32 %s30, 1
        %s276 = smul.addr %s275, 16
        %s277 = scalar_lea.vmem [#allocation2], %s276
        %p278 = pneg %p43
        %p279 = pneg %p40
        %p280 = pneg %p64
        %p281 = pneg %p61
        %p282 = pneg %p85
        %p283 = pneg %p82
        %p284 = pneg %p106
        %p285 = pneg %p103
        %p286 = pneg %p132
        %p287 = pneg %p129
        %p288 = scmp.lt.s32.totalorder %s22, 1
        %s289 = scalar_select %p288, %s22, 1
        %s290 = smul.addr %s289, 4
        %s291 = smul.addr %s290, 8
        %s292 = scalar_lea.vmem %s4, %s291
        %p293 = pneg %p158
        %p294 = pneg %p155
        %p295 = scmp.lt.s32.totalorder %s22, 1
        %s296 = scalar_select %p295, %s22, 1
        %s297 = smul.addr %s296, 4
        %s298 = smul.addr %s297, 8
        %s299 = scalar_lea.vmem %s5, %s298
        %p300 = scmp.lt.s32.totalorder %s22, 1
        %s301 = scalar_select %p300, %s22, 1
        %s302 = smul.addr %s301, 4
        %s303 = smul.addr %s302, 8
        %s304 = scalar_lea.vmem %s4, %s303
        %p305 = scmp.lt.s32.totalorder %s22, 1
        %s306 = scalar_select %p305, %s22, 1
        %s307 = smul.addr %s306, 4
        %s308 = smul.addr %s307, 8
        %s309 = scalar_lea.vmem %s5, %s308
        %v312 = vld [vmem:[%s252] sm:$0xf]
        %v313 = vld [vmem:[%s252 + $0x4] sm:$0xf]
        %v314 = vld [vmem:[%s252 + $0x8] sm:$0xf]
        %v315 = vld [vmem:[%s252 + $0xc] sm:$0xf]
        %v320 = vunpack.c.l.b16 %v312
        %v321 = vunpack.c.l.b16 %v313
        %v322 = vunpack.c.l.b16 %v314
        %v323 = vunpack.c.l.b16 %v315
        %v324 = vpack.c.b16 %v321, %v320
        %v325 = vpack.c.b16 %v323, %v322
        %vm326 = vcmask 523264
        %v328 = vsel %vm326, %v324, 0
        %v331 = vsel %vm326, %v325, 0
        %333 = vmatpush.bf16.msra.mxu0 0
        %334 = vmatpush.bf16.msra.mxu0 0
        %335 = vmatpush.bf16.msra.mxu0 0
        %336 = vmatpush.bf16.msra.mxu0 0
        %337 = vmatpush.bf16.msra.mxu0 1065369472
        %338 = vmatpush.bf16.msra.mxu0 1065369472
        %339 = vmatpush.bf16.msra.mxu0 1065369472
        %340 = vmatpush.bf16.msra.mxu0 1065369472
        %341 = vmatmul.bf16.gmra.mxu0 %v328
        %v342 = vpop.f32.mrf.mxu0
        %v343 = vadd.f32 0.0, %v342
        %v344 = vpop.f32.mrf.mxu0
        %v345 = vadd.f32 0.0, %v344
        %346 = vmatmul.bf16.gmra.mxu0 %v331
        %v347 = vpop.f32.mrf.mxu0
        %v348 = vadd.f32 0.0, %v347
        %v349 = vpop.f32.mrf.mxu0
        %v350 = vadd.f32 0.0, %v349
        %351 = vdwg.mxu0
        %v352 = vmul.f32 %v343, 0.015625
        %v353 = vmul.f32 %v345, 0.015625
        %v354 = vmul.f32 %v348, 0.015625
        %v355 = vmul.f32 %v350, 0.015625
        %v356 = vld [vmem:[#allocation6] sm:$0xf]
        %v357 = vld [vmem:[#allocation6 + $0x4] sm:$0xf]
        %v358 = vld [vmem:[#allocation6 + $0x8] sm:$0xf]
        %v359 = vld [vmem:[#allocation6 + $0xc] sm:$0xf]
        %v360 = vpack.c.bf16 %v353, %v352
        %v361 = vpack.c.bf16 %v355, %v354
        %v366 = vunpack.c.l.b16 %v356
        %v367 = vunpack.c.l.b16 %v357
        %v368 = vunpack.c.l.b16 %v358
        %v369 = vunpack.c.l.b16 %v359
        %v370 = vpack.c.b16 %v367, %v366
        %v371 = vpack.c.b16 %v369, %v368
        %vm372 = vcmask 261120
        %v374 = vsel %vm372, %v370, 0
        %v377 = vsel %vm372, %v371, 0
        %379 = vmatpush.bf16.msra.mxu0 0
        %380 = vmatpush.bf16.msra.mxu0 0
        %381 = vmatpush.bf16.msra.mxu0 0
        %382 = vmatpush.bf16.msra.mxu0 0
        %383 = vmatpush.bf16.msra.mxu0 0
        %384 = vmatpush.bf16.msra.mxu0 0
        %385 = vmatpush.bf16.msra.mxu0 %v361
        %386 = vmatpush.bf16.msra.mxu0 %v360
        %387 = vmatmul.bf16.gmra.mxu0 %v374
        %v388 = vpop.f32.mrf.mxu0
        %v389 = vadd.f32 0.0, %v388
        %v390 = vpop.f32.mrf.mxu0
        %v391 = vadd.f32 0.0, %v390
        %392 = vmatmul.bf16.gmra.mxu0 %v377
        %v393 = vpop.f32.mrf.mxu0
        %v394 = vadd.f32 0.0, %v393
        %v395 = vpop.f32.mrf.mxu0
        %v396 = vadd.f32 0.0, %v395
        %397 = vdwg.mxu0
        %vm398 = vcmask 7168
        %399 = vst.msk [vmem:[%s304] sm:$0xff] %vm398, %v389
        %400 = vst.msk [vmem:[%s304 + $0x8] sm:$0xff] %vm398, %v391
        %401 = vst.msk [vmem:[%s304 + $0x10] sm:$0xff] %vm398, %v394
        %402 = vst.msk [vmem:[%s304 + $0x18] sm:$0xff] %vm398, %v396
        %v403 = vld [vmem:[#allocation4] sm:$0xf]
        %v404 = vld [vmem:[#allocation4 + $0x4] sm:$0xf]
        %v405 = vld [vmem:[#allocation4 + $0x8] sm:$0xf]
        %v406 = vld [vmem:[#allocation4 + $0xc] sm:$0xf]
        %v411 = vunpack.c.l.b16 %v403
        %v412 = vunpack.c.l.b16 %v404
        %v413 = vunpack.c.l.b16 %v405
        %v414 = vunpack.c.l.b16 %v406
        %v415 = vpack.c.b16 %v412, %v411
        %v416 = vpack.c.b16 %v414, %v413
        %v420 = vsel %vm372, %v415, 0
        %v423 = vsel %vm372, %v416, 0
        %425 = vmatpush.bf16.msra.mxu0 0
        %426 = vmatpush.bf16.msra.mxu0 0
        %427 = vmatpush.bf16.msra.mxu0 0
        %428 = vmatpush.bf16.msra.mxu0 0
        %429 = vmatpush.bf16.msra.mxu0 0
        %430 = vmatpush.bf16.msra.mxu0 0
        %431 = vmatpush.bf16.msra.mxu0 %v325
        %432 = vmatpush.bf16.msra.mxu0 %v324
        %433 = vmatmul.bf16.gmra.mxu0 %v420
        %v434 = vpop.f32.mrf.mxu0
        %v435 = vadd.f32 0.0, %v434
        %v436 = vpop.f32.mrf.mxu0
        %v437 = vadd.f32 0.0, %v436
        %438 = vmatmul.bf16.gmra.mxu0 %v423
        %v439 = vpop.f32.mrf.mxu0
        %v440 = vadd.f32 0.0, %v439
        %v441 = vpop.f32.mrf.mxu0
        %v442 = vadd.f32 0.0, %v441
        %443 = vdwg.mxu0
        %v444 = vmul.f32 %v435, %v435
        %v445 = vmul.f32 %v437, %v437
        %v446 = vmul.f32 %v440, %v440
        %v447 = vmul.f32 %v442, %v442
        %v448 = vsel %vm326, %v444, 0.0
        %v449 = vsel %vm326, %v445, 0.0
        %v450 = vadd.f32 %v448, %v449
        %v451 = vsel %vm326, %v446, 0.0
        %v452 = vadd.f32 %v450, %v451
        %v453 = vsel %vm326, %v447, 0.0
        %v454 = vadd.f32 %v452, %v453
        %v455 = vrot.slane %v454, 4
        %v456 = vadd.f32 %v454, %v455
        %v457 = vrot.slane %v456, 2
        %v458 = vadd.f32 %v456, %v457
        %v459 = vrot.slane %v458, 1
        %v460 = vadd.f32 %v458, %v459
        %v461 = vmax.f32 %v460, 1e-24
        %v462 = vrsqrt.pop %v461
        %v463 = vmul.f32 %v462, %v461
        %v464 = vmul.f32 %v463, %v462
        %v465 = vmul.f32 0.5, %v464
        %v466 = vsub.f32 1.5, %v465
        %v467 = vmul.f32 %v462, %v466
        %vm468 = vweird.f32 %v461
        %vm469 = vweird.f32 %v462
        %vm470 = vmor %vm468, %vm469
        %v471 = vsel %vm470, %v462, %v467
        %v472 = vmul.f32 %v471, 0.8264463
        %v473 = vmul.f32 %v435, %v472
        %v474 = vmul.f32 %v437, %v472
        %v475 = vmul.f32 %v440, %v472
        %v476 = vmul.f32 %v442, %v472
        %v477 = vsel %vm326, %v473, -inf
        %478 = vmax.xlane.f32.xlu0 %v477
        %v479 = vpop.xlane.xlu0 %478
        %v480 = vsel %vm326, %v474, -inf
        %481 = vmax.xlane.f32.xlu0 %v480
        %v482 = vpop.xlane.xlu0 %481
        %v483 = vsel %vm326, %v475, -inf
        %484 = vmax.xlane.f32.xlu0 %v483
        %v485 = vpop.xlane.xlu0 %484
        %v486 = vsel %vm326, %v476, -inf
        %487 = vmax.xlane.f32.xlu0 %v486
        %v488 = vpop.xlane.xlu0 %487
        %v489 = vsub.f32 %v473, %v479
        %v490 = vsub.f32 %v474, %v482
        %v491 = vsub.f32 %v475, %v485
        %v492 = vsub.f32 %v476, %v488
        %v493 = vmul.f32 %v489, 1.442695
        %v494 = vpow.pop %v493
        %v495 = vmul.f32 %v490, 1.442695
        %v496 = vpow.pop %v495
        %v497 = vmul.f32 %v491, 1.442695
        %v498 = vpow.pop %v497
        %v499 = vmul.f32 %v492, 1.442695
        %v500 = vpow.pop %v499
        %v501 = vsel %vm326, %v494, 0.0
        %502 = vadd.xlane.f32.xlu0 %v501
        %v503 = vpop.xlane.xlu0 %502
        %v504 = vsel %vm326, %v496, 0.0
        %505 = vadd.xlane.f32.xlu0 %v504
        %v506 = vpop.xlane.xlu0 %505
        %v507 = vsel %vm326, %v498, 0.0
        %508 = vadd.xlane.f32.xlu0 %v507
        %v509 = vpop.xlane.xlu0 %508
        %v510 = vsel %vm326, %v500, 0.0
        %511 = vadd.xlane.f32.xlu0 %v510
        %v512 = vpop.xlane.xlu0 %511
        %v513 = vrcp.pop %v503
        %v514 = vrcp.pop %v506
        %v515 = vrcp.pop %v509
        %v516 = vrcp.pop %v512
        %v517 = vmul.f32 %v494, %v513
        %v518 = vmul.f32 %v496, %v514
        %v519 = vmul.f32 %v498, %v515
        %v520 = vmul.f32 %v500, %v516
        %v521 = vpack.c.bf16 %v517, %v517
        %v522 = vpack.c.bf16 %v518, %v518
        %v523 = vpack.c.bf16 %v519, %v519
        %v524 = vpack.c.bf16 %v520, %v520
        %v525 = vrot.slane %v312, 2
        %v526 = vrot.slane %v313, 2
        %v527 = vrot.slane %v314, 2
        %v528 = vrot.slane %v315, 2
        %vm529 = vcmask 1041408
        %v532 = vsel %vm529, %v312, %v525
        %vm533 = vcmask 1043458
        %v534 = vsel %vm533, %v312, %v525
        %v536 = vrot.slane %v534, 2
        %v539 = vsel %vm529, %v313, %v526
        %v540 = vsel %vm533, %v313, %v526
        %v542 = vrot.slane %v540, 2
        %v545 = vsel %vm529, %v314, %v527
        %v546 = vsel %vm533, %v314, %v527
        %v548 = vrot.slane %v546, 2
        %v551 = vsel %vm529, %v315, %v528
        %v552 = vsel %vm533, %v315, %v528
        %v554 = vrot.slane %v552, 2
        %v559 = vrot.slane %v521, 2
        %v560 = vrot.slane %v522, 2
        %v561 = vrot.slane %v523, 2
        %v562 = vrot.slane %v524, 2
        %v565 = vsel %vm529, %v521, %v559
        %v566 = vsel %vm533, %v521, %v559
        %v568 = vrot.slane %v566, 2
        %v571 = vsel %vm529, %v522, %v560
        %v572 = vsel %vm533, %v522, %v560
        %v574 = vrot.slane %v572, 2
        %v577 = vsel %vm529, %v523, %v561
        %v578 = vsel %vm533, %v523, %v561
        %v580 = vrot.slane %v578, 2
        %v583 = vsel %vm529, %v524, %v562
        %v584 = vsel %vm533, %v524, %v562
        %v586 = vrot.slane %v584, 2
        %v587 = vsel %vm326, %v532, 0
        %v589 = vsel %vm326, %v565, 0
        %591 = vmatpush.bf16.xpose.msra.mxu0 0
        %592 = vmatpush.bf16.xpose.msra.mxu0 0
        %593 = vmatpush.bf16.xpose.msra.mxu0 0
        %594 = vmatpush.bf16.xpose.msra.mxu0 0
        %595 = vmatpush.bf16.xpose.msra.mxu0 0
        %596 = vmatpush.bf16.xpose.msra.mxu0 0
        %597 = vmatpush.bf16.xpose.msra.mxu0 0
        %598 = vmatpush.bf16.xpose.msra.mxu0 %v589
        %599 = vmatmul.bf16.gmra.mxu0 %v587
        %v600 = vpop.f32.mrf.mxu0
        %v601 = vadd.f32 0.0, %v600
        %v602 = vpop.f32.mrf.mxu0
        %603 = vdwg.mxu0
        %v605 = vsel %vm326, %v536, 0
        %v608 = vsel %vm326, %v568, 0
        %610 = vmatpush.bf16.xpose.msra.mxu0 0
        %611 = vmatpush.bf16.xpose.msra.mxu0 0
        %612 = vmatpush.bf16.xpose.msra.mxu0 0
        %613 = vmatpush.bf16.xpose.msra.mxu0 0
        %614 = vmatpush.bf16.xpose.msra.mxu0 0
        %615 = vmatpush.bf16.xpose.msra.mxu0 0
        %616 = vmatpush.bf16.xpose.msra.mxu0 0
        %617 = vmatpush.bf16.xpose.msra.mxu0 %v608
        %618 = vmatmul.bf16.gmra.mxu0 %v605
        %v619 = vpop.f32.mrf.mxu0
        %v620 = vadd.f32 0.0, %v619
        %v621 = vpop.f32.mrf.mxu0
        %622 = vdwg.mxu0
        %v623 = vsel %vm326, %v539, 0
        %v625 = vsel %vm326, %v571, 0
        %627 = vmatpush.bf16.xpose.msra.mxu0 0
        %628 = vmatpush.bf16.xpose.msra.mxu0 0
        %629 = vmatpush.bf16.xpose.msra.mxu0 0
        %630 = vmatpush.bf16.xpose.msra.mxu0 0
        %631 = vmatpush.bf16.xpose.msra.mxu0 0
        %632 = vmatpush.bf16.xpose.msra.mxu0 0
        %633 = vmatpush.bf16.xpose.msra.mxu0 0
        %634 = vmatpush.bf16.xpose.msra.mxu0 %v625
        %635 = vmatmul.bf16.gmra.mxu0 %v623
        %v636 = vpop.f32.mrf.mxu0
        %v637 = vadd.f32 0.0, %v636
        %v638 = vpop.f32.mrf.mxu0
        %639 = vdwg.mxu0
        %v641 = vsel %vm326, %v542, 0
        %v644 = vsel %vm326, %v574, 0
        %646 = vmatpush.bf16.xpose.msra.mxu0 0
        %647 = vmatpush.bf16.xpose.msra.mxu0 0
        %648 = vmatpush.bf16.xpose.msra.mxu0 0
        %649 = vmatpush.bf16.xpose.msra.mxu0 0
        %650 = vmatpush.bf16.xpose.msra.mxu0 0
        %651 = vmatpush.bf16.xpose.msra.mxu0 0
        %652 = vmatpush.bf16.xpose.msra.mxu0 0
        %653 = vmatpush.bf16.xpose.msra.mxu0 %v644
        %654 = vmatmul.bf16.gmra.mxu0 %v641
        %v655 = vpop.f32.mrf.mxu0
        %v656 = vadd.f32 0.0, %v655
        %v657 = vpop.f32.mrf.mxu0
        %658 = vdwg.mxu0
        %v659 = vsel %vm326, %v545, 0
        %v661 = vsel %vm326, %v577, 0
        %663 = vmatpush.bf16.xpose.msra.mxu0 0
        %664 = vmatpush.bf16.xpose.msra.mxu0 0
        %665 = vmatpush.bf16.xpose.msra.mxu0 0
        %666 = vmatpush.bf16.xpose.msra.mxu0 0
        %667 = vmatpush.bf16.xpose.msra.mxu0 0
        %668 = vmatpush.bf16.xpose.msra.mxu0 0
        %669 = vmatpush.bf16.xpose.msra.mxu0 0
        %670 = vmatpush.bf16.xpose.msra.mxu0 %v661
        %671 = vmatmul.bf16.gmra.mxu0 %v659
        %v672 = vpop.f32.mrf.mxu0
        %v673 = vadd.f32 0.0, %v672
        %v674 = vpop.f32.mrf.mxu0
        %675 = vdwg.mxu0
        %v677 = vsel %vm326, %v548, 0
        %v680 = vsel %vm326, %v580, 0
        %682 = vmatpush.bf16.xpose.msra.mxu0 0
        %683 = vmatpush.bf16.xpose.msra.mxu0 0
        %684 = vmatpush.bf16.xpose.msra.mxu0 0
        %685 = vmatpush.bf16.xpose.msra.mxu0 0
        %686 = vmatpush.bf16.xpose.msra.mxu0 0
        %687 = vmatpush.bf16.xpose.msra.mxu0 0
        %688 = vmatpush.bf16.xpose.msra.mxu0 0
        %689 = vmatpush.bf16.xpose.msra.mxu0 %v680
        %690 = vmatmul.bf16.gmra.mxu0 %v677
        %v691 = vpop.f32.mrf.mxu0
        %v692 = vadd.f32 0.0, %v691
        %v693 = vpop.f32.mrf.mxu0
        %694 = vdwg.mxu0
        %v695 = vsel %vm326, %v551, 0
        %v697 = vsel %vm326, %v583, 0
        %699 = vmatpush.bf16.xpose.msra.mxu0 0
        %700 = vmatpush.bf16.xpose.msra.mxu0 0
        %701 = vmatpush.bf16.xpose.msra.mxu0 0
        %702 = vmatpush.bf16.xpose.msra.mxu0 0
        %703 = vmatpush.bf16.xpose.msra.mxu0 0
        %704 = vmatpush.bf16.xpose.msra.mxu0 0
        %705 = vmatpush.bf16.xpose.msra.mxu0 0
        %706 = vmatpush.bf16.xpose.msra.mxu0 %v697
        %707 = vmatmul.bf16.gmra.mxu0 %v695
        %v708 = vpop.f32.mrf.mxu0
        %v709 = vadd.f32 0.0, %v708
        %v710 = vpop.f32.mrf.mxu0
        %711 = vdwg.mxu0
        %v713 = vsel %vm326, %v554, 0
        %v716 = vsel %vm326, %v586, 0
        %718 = vmatpush.bf16.xpose.msra.mxu0 0
        %719 = vmatpush.bf16.xpose.msra.mxu0 0
        %720 = vmatpush.bf16.xpose.msra.mxu0 0
        %721 = vmatpush.bf16.xpose.msra.mxu0 0
        %722 = vmatpush.bf16.xpose.msra.mxu0 0
        %723 = vmatpush.bf16.xpose.msra.mxu0 0
        %724 = vmatpush.bf16.xpose.msra.mxu0 0
        %725 = vmatpush.bf16.xpose.msra.mxu0 %v716
        %726 = vmatmul.bf16.gmra.mxu0 %v713
        %v727 = vpop.f32.mrf.mxu0
        %v728 = vadd.f32 0.0, %v727
        %v729 = vpop.f32.mrf.mxu0
        %730 = vdwg.mxu0
        %v731 = vld [vmem:[#allocation7] sm:$0xf]
        %v732 = vld [vmem:[#allocation7 + $0x4] sm:$0xf]
        %v733 = vld [vmem:[#allocation7 + $0x8] sm:$0xf]
        %v734 = vld [vmem:[#allocation7 + $0xc] sm:$0xf]
        %743 = vst [vmem:[#allocation1] ss:$2 sm:$0xff] %v601
        %s744 = scalar_lea.vmem [#allocation1], 1
        %745 = vst [vmem:[%s744] ss:$2 sm:$0xff] %v620
        %s746 = scalar_lea.vmem [#allocation1], 16
        %747 = vst [vmem:[%s746] ss:$2 sm:$0xff] %v637
        %s748 = scalar_lea.vmem [#allocation1], 17
        %749 = vst [vmem:[%s748] ss:$2 sm:$0xff] %v656
        %s750 = scalar_lea.vmem [#allocation1], 32
        %751 = vst [vmem:[%s750] ss:$2 sm:$0xff] %v673
        %s752 = scalar_lea.vmem [#allocation1], 33
        %753 = vst [vmem:[%s752] ss:$2 sm:$0xff] %v692
        %s754 = scalar_lea.vmem [#allocation1], 48
        %755 = vst [vmem:[%s754] ss:$2 sm:$0xff] %v709
        %s756 = scalar_lea.vmem [#allocation1], 49
        %757 = vst [vmem:[%s756] ss:$2 sm:$0xff] %v728
        %v758 = vld.sshfl [vmem:[#allocation1] sm:$0xff pattern:$0x75316420]
        %v759 = vld.sshfl [vmem:[#allocation1 + $0x10] sm:$0xff pattern:$0x75316420]
        %v760 = vld.sshfl [vmem:[#allocation1 + $0x20] sm:$0xff pattern:$0x75316420]
        %v761 = vld.sshfl [vmem:[#allocation1 + $0x30] sm:$0xff pattern:$0x75316420]
        %v766 = vpack.c.bf16 %v759, %v758
        %v767 = vpack.c.bf16 %v761, %v760
        %v772 = vunpack.c.l.b16 %v731
        %v773 = vunpack.c.l.b16 %v732
        %v774 = vunpack.c.l.b16 %v733
        %v775 = vunpack.c.l.b16 %v734
        %v776 = vpack.c.b16 %v773, %v772
        %v777 = vpack.c.b16 %v775, %v774
        %v779 = vsel %vm372, %v776, 0
        %v782 = vsel %vm372, %v777, 0
        %784 = vmatpush.bf16.msra.mxu0 0
        %785 = vmatpush.bf16.msra.mxu0 0
        %786 = vmatpush.bf16.msra.mxu0 0
        %787 = vmatpush.bf16.msra.mxu0 0
        %788 = vmatpush.bf16.msra.mxu0 0
        %789 = vmatpush.bf16.msra.mxu0 0
        %790 = vmatpush.bf16.msra.mxu0 %v767
        %791 = vmatpush.bf16.msra.mxu0 %v766
        %792 = vmatmul.bf16.gmra.mxu0 %v779
        %v793 = vpop.f32.mrf.mxu0
        %v794 = vadd.f32 0.0, %v793
        %v795 = vpop.f32.mrf.mxu0
        %v796 = vadd.f32 0.0, %v795
        %797 = vmatmul.bf16.gmra.mxu0 %v782
        %v798 = vpop.f32.mrf.mxu0
        %v799 = vadd.f32 0.0, %v798
        %v800 = vpop.f32.mrf.mxu0
        %v801 = vadd.f32 0.0, %v800
        %802 = vdwg.mxu0
        %vm803 = vcmask 31744
        %804 = vst.msk [vmem:[%s309] sm:$0xff] %vm803, %v794
        %805 = vst.msk [vmem:[%s309 + $0x8] sm:$0xff] %vm803, %v796
        %806 = vst.msk [vmem:[%s309 + $0x10] sm:$0xff] %vm803, %v799
        %807 = vst.msk [vmem:[%s309 + $0x18] sm:$0xff] %vm803, %v801
        %p808 = scmp.lt.s32.totalorder %s22, 1
        %s809 = scalar_select %p808, %s22, 1
        %s810 = smul.addr %s809, 4
        %s811 = smul.addr %s810, 8
        %s812 = scalar_lea.vmem %s4, %s811
        %p813 = scmp.lt.s32.totalorder %s22, 1
        %s814 = scalar_select %p813, %s22, 1
        %s815 = smul.addr %s814, 4
        %s816 = smul.addr %s815, 8
        %s817 = scalar_lea.vmem %s5, %s816
        // Predicated region
        $region53: #{tpu_custom_call.1} parent=35 // pred_check
          %p818 = pneg %p129
        $region54: #{tpu_custom_call.1} parent=35 // pred_check_branch
          %820 = sbr.rel (%p818) target = $region56
        $region55: #{tpu_custom_call.1} parent=35 // pred_region
          _
        $region56: #{tpu_custom_call.1} parent=35 // pred_fallthru
          _
        // Predicated region
        $region57: #{tpu_custom_call.1} parent=35 // pred_check
          %p821 = pneg %p155
        $region58: #{tpu_custom_call.1} parent=35 // pred_check_branch
          %823 = sbr.rel (%p821) target = $region60
        $region59: #{tpu_custom_call.1} parent=35 // pred_region
          _
        $region60: #{tpu_custom_call.1} parent=35 // pred_fallthru
          _
      $region36: #{tpu_custom_call.1} parent=5 // pred_fallthru
        _
      %p824 = scmp.le.s32.totalorder 2, %s17
      // Predicated region
      $region61: #{tpu_custom_call.1} parent=5 // pred_check
        %p825 = pneg %p824
      $region62: #{tpu_custom_call.1} parent=5 // pred_check_branch
        %827 = sbr.rel (%p825) target = $region64
      $region63: #{tpu_custom_call.1} parent=5 // pred_region
        %s828 = ssub.s32 %s17, 2
        // Predicated region
        $region65: #{tpu_custom_call.1} parent=63 // pred_check
          %p829 = pneg %p135
        $region66: #{tpu_custom_call.1} parent=63 // pred_check_branch
          %831 = sbr.rel (%p829) target = $region68
        $region67: #{tpu_custom_call.1} parent=63 // pred_region
          %p832 = scmp.lt.s32.totalorder %s23, 1
          %s833 = scalar_select %p832, %s23, 1
          %s834 = smul.addr %s833, 4
          %s835 = smul.addr %s834, 8
          %s836 = scalar_lea.vmem %s4, %s835
        $region68: #{tpu_custom_call.1} parent=63 // pred_fallthru
          _
        // Predicated region
        $region69: #{tpu_custom_call.1} parent=63 // pred_check
          %p837 = pneg %p161
        $region70: #{tpu_custom_call.1} parent=63 // pred_check_branch
          %839 = sbr.rel (%p837) target = $region72
        $region71: #{tpu_custom_call.1} parent=63 // pred_region
          %p840 = scmp.lt.s32.totalorder %s23, 1
          %s841 = scalar_select %p840, %s23, 1
          %s842 = smul.addr %s841, 4
          %s843 = smul.addr %s842, 8
          %s844 = scalar_lea.vmem %s5, %s843
        $region72: #{tpu_custom_call.1} parent=63 // pred_fallthru
          _
      $region64: #{tpu_custom_call.1} parent=5 // pred_fallthru
        _
    $region6: #{tpu_custom_call.1} parent=1 // loop_footer
      %s21 = sadd.s32 1, %s17
    $region7: #{tpu_custom_call.1} parent=1 // loop_footer_branch
      %16 = sbr.rel target = $region3
    $region8: #{tpu_custom_call.1} parent=1 // loop_exit
      _
    %845 = vsyncpa [#allocation3], 1
    %s846 = scalar_lea.sflag [#allocation3], 1
    %847 = vsyncpa %s846, 1
    %848 = vsyncpa [#allocation5], 1
    %849 = vsyncpa [#allocation8], 1

</llo_original>
